<compile_context>
chip_gen: v6e
topology: v6e:2x2x1
jax: 0.10.0
libtpu: 0.0.40
codegen_flags: <defaults>
</compile_context>

<pallas_src>
import functools
import math

import jax
import jax.numpy as jnp
from jax import lax
from jax.experimental import pallas as pl
from jax.experimental.pallas import tpu as pltpu

EPS = 1e-5
MASK_BIAS = -1e30   # finite additive causal mask; scores stay f32 so no overflow to -inf


def _rmsnorm(x, w):
    # x: (S, E) f32, w: (1, E) f32
    ms = jnp.mean(x * x, axis=-1, keepdims=True)
    return x * lax.rsqrt(ms + EPS) * w


# ---------------------------------------------------------------------------
# One (batch, layer) grid step: one transformer block on the VMEM-resident residual.
# ---------------------------------------------------------------------------
def _fused_model_kernel(x_ref, n1_ref, wqkv_ref, wo_ref, n2_ref, w12_ref, w3_ref,
                        nf_ref, wred_ref, whaz_ref,
                        logits_ref, hazT_ref,
                        resid_ref,
                        *, num_heads, compute_dtype):
    l = pl.program_id(1)

    @pl.when(l == 0)
    def _init():
        resid_ref[...] = x_ref[0].astype(jnp.float32)

    x = resid_ref[...]                                    # (S, E) f32 residual stream
    S, E = x.shape
    hd = E // num_heads
    H = w12_ref.shape[-1] // 2

    # Causal additive bias, (S, S) f32, shared by all heads (never materialized per-head).
    row = lax.broadcasted_iota(jnp.int32, (S, S), 0)
    col = lax.broadcasted_iota(jnp.int32, (S, S), 1)
    bias = jnp.where(col <= row, 0.0, MASK_BIAS).astype(jnp.float32)

    # ---------------- attention branch ----------------
    h = _rmsnorm(x, n1_ref[0].astype(jnp.float32))
    # ONE fat lane-dense QKV matmul: (S, E) @ (E, 3E), columns packed [Q | K | V].
    qkv = jnp.dot(h.astype(compute_dtype), wqkv_ref[0],
                  preferred_element_type=jnp.float32)                       # (S, 3E) f32

    # Per-head scores / softmax / PV with 2-D ops only.  Head slices are hd-wide lane slices
    # of the [Q|K|V] blocks (hd == 128 in realistic configs -> free views); peak score memory
    # stays at S*S instead of nh*S*S and no in-kernel 3-D transposes are needed.
    ctx_heads = []
    for hh in range(num_heads):
        q = qkv[:, hh * hd:(hh + 1) * hd].astype(compute_dtype)             # scale pre-folded
        k = qkv[:, E + hh * hd:E + (hh + 1) * hd].astype(compute_dtype)
        v = qkv[:, 2 * E + hh * hd:2 * E + (hh + 1) * hd].astype(compute_dtype)
        s = lax.dot_general(q, k, (((1,), (1,)), ((), ())),
                            preferred_element_type=jnp.float32) + bias      # (S, S) f32
        m = jnp.max(s, axis=-1, keepdims=True)
        p = jnp.exp(s - m)
        denom = jnp.sum(p, axis=-1, keepdims=True)
        ctx = jnp.dot(p.astype(compute_dtype), v,
                      preferred_element_type=jnp.float32)                   # (S, hd) unnormalized
        # normalize AFTER PV: S*hd elements instead of S*S; reciprocal on the EUP slot.
        ctx_heads.append(ctx * pl.reciprocal(denom, approx=True))

    ctx2 = jnp.concatenate(ctx_heads, axis=-1)                              # (S, E)
    # head reduction happens inside this single MXU contraction over E = nh*hd
    att = jnp.dot(ctx2.astype(compute_dtype), wo_ref[0],
                  preferred_element_type=jnp.float32)                       # (S, E)
    x = x + att

    # ---------------- feed-forward (SwiGLU) branch ----------------
    h2 = _rmsnorm(x, n2_ref[0].astype(jnp.float32))
    gu = jnp.dot(h2.astype(compute_dtype), w12_ref[0],
                 preferred_element_type=jnp.float32)                        # (S, 2H) lane-dense
    g = gu[:, :H]
    u = gu[:, H:]
    ff = jnp.dot((jax.nn.silu(g) * u).astype(compute_dtype), w3_ref[0],
                 preferred_element_type=jnp.float32)                        # (S, E)
    x = x + ff

    resid_ref[...] = x

    # ---------------- final RMSNorm + ContextLengthReduction + hazard head ----------------
    @pl.when(l == pl.num_programs(1) - 1)
    def _finalize():
        hN = _rmsnorm(x, nf_ref[...].astype(jnp.float32))                   # (S, E)
        logits = jnp.dot(wred_ref[...], hN.astype(compute_dtype),
                         preferred_element_type=jnp.float32)                # (S_out, E)
        # hazard head on the MXU; stored lane-dense as (1, S_out), transposed in the wrapper.
        hazT = lax.dot_general(whaz_ref[...], logits.astype(compute_dtype),
                               (((1,), (1,)), ((), ())),
                               preferred_element_type=jnp.float32)          # (1, S_out)
        logits_ref[0] = logits.astype(logits_ref.dtype)
        hazT_ref[0] = hazT.astype(hazT_ref.dtype)


# ---------------------------------------------------------------------------
# Weight packing (layer axis leading; fat [Q|K|V] and [gate|up] blocks; Q pre-scaled).
# ---------------------------------------------------------------------------
def _pack_layer_params(layers, num_heads, compute_dtype):
    E = layers[0]['wq'].shape[0]
    hd = E // num_heads
    scale = 1.0 / math.sqrt(hd)
    n1 = jnp.stack([p['norm1'] for p in layers]).astype(jnp.float32)             # (L, 1, E)
    n2 = jnp.stack([p['norm2'] for p in layers]).astype(jnp.float32)             # (L, 1, E)
    wqkv = jnp.stack([jnp.concatenate([p['wq'] * scale, p['wk'], p['wv']], axis=-1)
                      for p in layers]).astype(compute_dtype)                    # (L, E, 3E)
    wo = jnp.stack([p['wo'] for p in layers]).astype(compute_dtype)              # (L, E, E)
    w12 = jnp.stack([jnp.concatenate([p['w1'], p['w2']], axis=-1)
                     for p in layers]).astype(compute_dtype)                     # (L, E, 2H)
    w3 = jnp.stack([p['w3'] for p in layers]).astype(compute_dtype)              # (L, H, E)
    return n1, wqkv, wo, n2, w12, w3


def _vmem_limit_bytes(S, S_out, E, H, compute_dtype, io_dtype):
    cb = jnp.dtype(compute_dtype).itemsize
    xb = jnp.dtype(io_dtype).itemsize
    layer_w = 2 * E * 4 + (3 * E * E + E * E + 2 * E * H + H * E) * cb   # norms f32 + matrices
    const_w = E * 4 + (S_out * S + E) * cb                               # final norm, w_red, w_haz
    io = (S * E + S_out * E + S_out) * xb
    resid = S * E * 4
    interm = (3 * S * E + 2 * S * S + 8 * S * E + 2 * S * H) * 4         # qkv/scores/ff scratch
    est = 2 * (layer_w + const_w + io) + resid + interm                  # x2 for double buffering
    est = int(est * 1.5)                                                 # headroom
    return int(min(100 * 2 ** 20, max(est, 32 * 2 ** 20)))


# ---------------------------------------------------------------------------
# Wrapper: one pallas_call, grid = (batch, layer).
# ---------------------------------------------------------------------------
def llama_like_forward(x, layers, final_norm_w, w_red, w_haz_row, num_heads,
                       compute_dtype=jnp.bfloat16):
    # compute_dtype=bf16 doubles MXU throughput and halves weight DMA/VMEM bytes on every
    # generation (MXUs are bf16-native); accumulation / residual / softmax stay float32.
    B, S, E = x.shape
    L = len(layers)
    S_out = w_red.shape[0]
    H = layers[0]['w1'].shape[1]
    assert E % num_heads == 0

    n1, wqkv, wo, n2, w12, w3 = _pack_layer_params(layers, num_heads, compute_dtype)
    nf = final_norm_w.astype(jnp.float32)
    wred_c = w_red.astype(compute_dtype)
    whaz_c = w_haz_row.astype(compute_dtype)

    kern = functools.partial(_fused_model_kernel, num_heads=num_heads,
                             compute_dtype=compute_dtype)

    logits, hazT = pl.pallas_call(
        kern,
        out_shape=(jax.ShapeDtypeStruct((B, S_out, E), x.dtype),
                   jax.ShapeDtypeStruct((B, 1, S_out), x.dtype)),
        grid=(B, L),
        in_specs=[
            pl.BlockSpec((1, S, E),     lambda b, l: (b, 0, 0)),   # x (per batch, resident over l)
            pl.BlockSpec((1, 1, E),     lambda b, l: (l, 0, 0)),   # norm1   (streamed per layer)
            pl.BlockSpec((1, E, 3 * E), lambda b, l: (l, 0, 0)),   # wqkv
            pl.BlockSpec((1, E, E),     lambda b, l: (l, 0, 0)),   # wo
            pl.BlockSpec((1, 1, E),     lambda b, l: (l, 0, 0)),   # norm2
            pl.BlockSpec((1, E, 2 * H), lambda b, l: (l, 0, 0)),   # w1|w2
            pl.BlockSpec((1, H, E),     lambda b, l: (l, 0, 0)),   # w3
            pl.BlockSpec((1, E),        lambda b, l: (0, 0)),      # final norm (const)
            pl.BlockSpec((S_out, S),    lambda b, l: (0, 0)),      # reduction weight (const)
            pl.BlockSpec((1, E),        lambda b, l: (0, 0)),      # hazard head row (const)
        ],
        out_specs=(pl.BlockSpec((1, S_out, E), lambda b, l: (b, 0, 0)),
                   pl.BlockSpec((1, 1, S_out), lambda b, l: (b, 0, 0))),
        scratch_shapes=[pltpu.VMEM((S, E), jnp.float32)],          # residual, carried over l
        compiler_params=pltpu.CompilerParams(
            dimension_semantics=("parallel", "arbitrary"),
            vmem_limit_bytes=_vmem_limit_bytes(S, S_out, E, H, compute_dtype, x.dtype)),
    )(x, n1, wqkv, wo, n2, w12, w3, nf, wred_c, whaz_c)

    log_hazards = jnp.swapaxes(hazT, 1, 2)    # (B, S_out, 1) — module output layout
    return log_hazards, logits


# ---------------------------------------------------------------------------
# Pure-JAX reference (same math) for a correctness check.
# ---------------------------------------------------------------------------
def ref_forward(x, layers, final_norm_w, w_red, w_haz_row, num_heads):
    def rms(v, w):
        return v * lax.rsqrt(jnp.mean(v * v, -1, keepdims=True) + EPS) * w

    B, S, E = x.shape
    hd = E // num_heads
    mask = jnp.tril(jnp.ones((S, S), bool))
    for p in layers:
        h = rms(x, p['norm1'])
        q = (h @ p['wq']).reshape(B, S, num_heads, hd).transpose(0, 2, 1, 3)
        k = (h @ p['wk']).reshape(B, S, num_heads, hd).transpose(0, 2, 1, 3)
        v = (h @ p['wv']).reshape(B, S, num_heads, hd).transpose(0, 2, 1, 3)
        s = jnp.einsum('bhqd,bhkd->bhqk', q, k) / math.sqrt(hd)
        s = jnp.where(mask, s, -jnp.inf)
        a = jax.nn.softmax(s, -1)
        ctx = jnp.einsum('bhqk,bhkd->bhqd', a, v).transpose(0, 2, 1, 3).reshape(B, S, E)
        x = x + ctx @ p['wo']
        h2 = rms(x, p['norm2'])
        x = x + (jax.nn.silu(h2 @ p['w1']) * (h2 @ p['w2'])) @ p['w3']
    hN = rms(x, final_norm_w)
    logits = jnp.einsum('os,bse->boe', w_red, hN)
    haz = jnp.sum(logits * w_haz_row, -1, keepdims=True)
    return haz, logits


if __name__ == "__main__":
    # small config consistent with the module
    cfg = dict(emb_dim=32, n_heads=4, n_layers=2, hidden_dim=64,
               max_width=4, max_height=4,            # attention context = 16
               max_in_width=4, max_in_height=4,      # in_context_length = 16
               max_out_width=2, max_out_height=2,    # out_context_length = 4
               dtype=jnp.float32)
    B = 2
    S_in = cfg['max_in_width'] * cfg['max_in_height']
    S_out = cfg['max_out_width'] * cfg['max_out_height']
    E, H = cfg['emb_dim'], cfg['hidden_dim']

    key = jax.random.PRNGKey(0)
    keys = iter(jax.random.split(key, 64))
    rnd = lambda shape: (0.05 * jax.random.normal(next(keys), shape)).astype(cfg['dtype'])

    # weights stored as (in, out) so kernels do x @ W (equivalent to nn.Linear's x @ W.T)
    layers = []
    for _ in range(cfg['n_layers']):
        layers.append(dict(
            norm1=jnp.ones((1, E), cfg['dtype']) + rnd((1, E)),
            wq=rnd((E, E)), wk=rnd((E, E)), wv=rnd((E, E)), wo=rnd((E, E)),
            norm2=jnp.ones((1, E), cfg['dtype']) + rnd((1, E)),
            w1=rnd((E, H)), w2=rnd((E, H)), w3=rnd((H, E)),
        ))
    final_norm_w = jnp.ones((1, E), cfg['dtype']) + rnd((1, E))
    w_red = rnd((S_out, S_in))          # ContextLengthReduction Linear weight (out_ctx, in_ctx)
    w_haz_row = rnd((1, E))             # hazard_head Linear weight (1, emb_dim)

    x = jax.random.normal(next(keys), (B, S_in, E), cfg['dtype'])

    haz_ref, logits_ref = ref_forward(x, layers, final_norm_w, w_red, w_haz_row, cfg['n_heads'])

    # default path: bf16 MXU operands, f32 accumulation
    log_hazards, logits = llama_like_forward(x, layers, final_norm_w, w_red, w_haz_row,
                                             cfg['n_heads'])
    jax.block_until_ready((log_hazards, logits))
    assert log_hazards.shape == (B, S_out, 1) and logits.shape == (B, S_out, E)
    assert jnp.allclose(logits, logits_ref, atol=2e-2, rtol=2e-2)
    assert jnp.allclose(log_hazards, haz_ref, atol=2e-2, rtol=2e-2)

    # exact-f32 path: tight check
    log_hazards32, logits32 = llama_like_forward(x, layers, final_norm_w, w_red, w_haz_row,
                                                 cfg['n_heads'], compute_dtype=jnp.float32)
    jax.block_until_ready((log_hazards32, logits32))
    assert jnp.allclose(logits32, logits_ref, atol=2e-3, rtol=2e-3)
    assert jnp.allclose(log_hazards32, haz_ref, atol=2e-3, rtol=2e-3)

    print("KERNEL_OK")
</pallas_src>

<mosaic_0001>
module attributes {stable_mosaic.version = 11 : i64} {
  func.func @_fused_model_kernel(%arg0: i32, %arg1: i32, %arg2: memref<1x16x32xf32, #tpu.memory_space<vmem>>, %arg3: memref<1x1x32xf32, #tpu.memory_space<vmem>>, %arg4: memref<1x32x96xbf16, #tpu.memory_space<vmem>>, %arg5: memref<1x32x32xbf16, #tpu.memory_space<vmem>>, %arg6: memref<1x1x32xf32, #tpu.memory_space<vmem>>, %arg7: memref<1x32x128xbf16, #tpu.memory_space<vmem>>, %arg8: memref<1x64x32xbf16, #tpu.memory_space<vmem>>, %arg9: memref<1x32xf32, #tpu.memory_space<vmem>>, %arg10: memref<4x16xbf16, #tpu.memory_space<vmem>>, %arg11: memref<1x32xbf16, #tpu.memory_space<vmem>>, %arg12: memref<1x4x32xf32, #tpu.memory_space<vmem>>, %arg13: memref<1x1x4xf32, #tpu.memory_space<vmem>>, %arg14: memref<16x32xf32, #tpu.memory_space<vmem>>) attributes {dimension_semantics = [#tpu.dimension_semantics<parallel>, #tpu.dimension_semantics<arbitrary>], iteration_bounds = array<i64: 2, 2>, scalar_prefetch = 0 : i64, scratch_operands = 1 : i64, tpu.core_type = #tpu.core_type<tc>, window_params = [{transform_indices = @transform_0, window_bounds = array<i64: 1, 16, 32>}, {transform_indices = @transform_1, window_bounds = array<i64: 1, 1, 32>}, {transform_indices = @transform_2, window_bounds = array<i64: 1, 32, 96>}, {transform_indices = @transform_3, window_bounds = array<i64: 1, 32, 32>}, {transform_indices = @transform_4, window_bounds = array<i64: 1, 1, 32>}, {transform_indices = @transform_5, window_bounds = array<i64: 1, 32, 128>}, {transform_indices = @transform_6, window_bounds = array<i64: 1, 64, 32>}, {pipeline_mode = #tpu.pipeline_mode<synchronous>, transform_indices = @transform_7, window_bounds = array<i64: 1, 32>}, {pipeline_mode = #tpu.pipeline_mode<synchronous>, transform_indices = @transform_8, window_bounds = array<i64: 4, 16>}, {pipeline_mode = #tpu.pipeline_mode<synchronous>, transform_indices = @transform_9, window_bounds = array<i64: 1, 32>}, {transform_indices = @transform_10, window_bounds = array<i64: 1, 4, 32>}, {transform_indices = @transform_11, window_bounds = array<i64: 1, 1, 4>}]} {
    %c0_i32 = arith.constant 0 : i32
    %0 = arith.cmpi eq, %arg1, %c0_i32 : i32
    %1 = arith.extui %0 : i1 to i32
    %c0_i32_0 = arith.constant 0 : i32
    %2 = arith.cmpi ne, %1, %c0_i32_0 : i32
    scf.if %2 {
      %c0_51 = arith.constant 0 : index
      %c0_52 = arith.constant 0 : index
      %c0_53 = arith.constant 0 : index
      %150 = vector.load %arg2[%c0_51, %c0_52, %c0_53] : memref<1x16x32xf32, #tpu.memory_space<vmem>>, vector<1x16x32xf32>
      %151 = vector.shape_cast %150 : vector<1x16x32xf32> to vector<16x32xf32>
      %c0_54 = arith.constant 0 : index
      %c0_55 = arith.constant 0 : index
      %152 = vector.load %arg14[%c0_54, %c0_55] : memref<16x32xf32, #tpu.memory_space<vmem>>, vector<16x32xf32>
      tpu.vector_store %arg14[%c0_54, %c0_55], %151 {strides = array<i32>} : memref<16x32xf32, #tpu.memory_space<vmem>>, vector<16x32xf32>,
    } else {
    }
    %c0 = arith.constant 0 : index
    %c0_1 = arith.constant 0 : index
    %3 = vector.load %arg14[%c0, %c0_1] : memref<16x32xf32, #tpu.memory_space<vmem>>, vector<16x32xf32>
    %4 = tpu.iota {dimensions = array<i32: 0>} : vector<16x16xi32>
    %5 = tpu.iota {dimensions = array<i32: 1>} : vector<16x16xi32>
    %6 = arith.cmpi sle, %5, %4 : vector<16x16xi32>
    %cst = arith.constant 0.000000e+00 : f32
    %cst_2 = arith.constant -1.000000e+30 : f32
    %7 = vector.broadcast %cst : f32 to vector<16x16xf32>
    %8 = vector.broadcast %cst_2 : f32 to vector<16x16xf32>
    %9 = arith.select %6, %7, %8 : vector<16x16xi1>, vector<16x16xf32>
    %c0_3 = arith.constant 0 : index
    %c0_4 = arith.constant 0 : index
    %c0_5 = arith.constant 0 : index
    %10 = vector.load %arg3[%c0_3, %c0_4, %c0_5] : memref<1x1x32xf32, #tpu.memory_space<vmem>>, vector<1x1x32xf32>
    %11 = vector.shape_cast %10 : vector<1x1x32xf32> to vector<1x32xf32>
    %12 = arith.mulf %3, %3 : vector<16x32xf32>
    %cst_6 = arith.constant dense<0.000000e+00> : vector<16xf32>
    %13 = vector.multi_reduction <add>, %12, %cst_6 [1] : vector<16x32xf32> to vector<16xf32>
    %14 = vector.shape_cast %13 : vector<16xf32> to vector<16x1xf32>
    %cst_7 = arith.constant 3.200000e+01 : f32
    %15 = vector.broadcast %cst_7 : f32 to vector<16x1xf32>
    %16 = arith.divf %14, %15 : vector<16x1xf32>
    %cst_8 = arith.constant 9.99999974E-6 : f32
    %17 = vector.broadcast %cst_8 : f32 to vector<16x1xf32>
    %18 = arith.addf %16, %17 : vector<16x1xf32>
    %19 = math.rsqrt %18 : vector<16x1xf32>
    %20 = vector.broadcast %19 : vector<16x1xf32> to vector<16x32xf32>
    %21 = arith.mulf %3, %20 : vector<16x32xf32>
    %22 = vector.broadcast %11 : vector<1x32xf32> to vector<16x32xf32>
    %23 = arith.mulf %21, %22 : vector<16x32xf32>
    %24 = arith.truncf %23 : vector<16x32xf32> to vector<16x32xbf16>
    %c0_9 = arith.constant 0 : index
    %c0_10 = arith.constant 0 : index
    %c0_11 = arith.constant 0 : index
    %25 = vector.load %arg4[%c0_9, %c0_10, %c0_11] : memref<1x32x96xbf16, #tpu.memory_space<vmem>>, vector<1x32x96xbf16>
    %26 = vector.shape_cast %25 : vector<1x32x96xbf16> to vector<32x96xbf16>
    %cst_12 = arith.constant dense<0.000000e+00> : vector<16x96xf32>
    %27 = tpu.matmul %24, %26, %cst_12 {dimension_numbers = #tpu.dot_dimension_numbers<[1], [0], [0], [1], [0, 0, 1, 1], [], []>} : vector<16x32xbf16>, vector<32x96xbf16>, vector<16x96xf32> -> vector<16x96xf32>
    %28 = vector.extract_strided_slice %27 {offsets = [0, 0], sizes = [16, 8], strides = [1, 1]} : vector<16x96xf32> to vector<16x8xf32>
    %29 = arith.truncf %28 : vector<16x8xf32> to vector<16x8xbf16>
    %30 = vector.extract_strided_slice %27 {offsets = [0, 32], sizes = [16, 8], strides = [1, 1]} : vector<16x96xf32> to vector<16x8xf32>
    %31 = arith.truncf %30 : vector<16x8xf32> to vector<16x8xbf16>
    %32 = vector.extract_strided_slice %27 {offsets = [0, 64], sizes = [16, 8], strides = [1, 1]} : vector<16x96xf32> to vector<16x8xf32>
    %33 = arith.truncf %32 : vector<16x8xf32> to vector<16x8xbf16>
    %cst_13 = arith.constant dense<0.000000e+00> : vector<16x16xf32>
    %34 = tpu.matmul %29, %31, %cst_13 {dimension_numbers = #tpu.dot_dimension_numbers<[1], [1], [0], [0], [0, 0, 1, 0], [], []>} : vector<16x8xbf16>, vector<16x8xbf16>, vector<16x16xf32> -> vector<16x16xf32>
    %35 = arith.addf %34, %9 : vector<16x16xf32>
    %cst_14 = arith.constant dense<0xFF800000> : vector<16xf32>
    %36 = vector.multi_reduction <maximumf>, %35, %cst_14 [1] : vector<16x16xf32> to vector<16xf32>
    %37 = vector.shape_cast %36 : vector<16xf32> to vector<16x1xf32>
    %38 = vector.broadcast %37 : vector<16x1xf32> to vector<16x16xf32>
    %39 = arith.subf %35, %38 : vector<16x16xf32>
    %40 = math.exp %39 : vector<16x16xf32>
    %cst_15 = arith.constant dense<0.000000e+00> : vector<16xf32>
    %41 = vector.multi_reduction <add>, %40, %cst_15 [1] : vector<16x16xf32> to vector<16xf32>
    %42 = vector.shape_cast %41 : vector<16xf32> to vector<16x1xf32>
    %43 = arith.truncf %40 : vector<16x16xf32> to vector<16x16xbf16>
    %cst_16 = arith.constant dense<0.000000e+00> : vector<16x8xf32>
    %44 = tpu.matmul %43, %33, %cst_16 {dimension_numbers = #tpu.dot_dimension_numbers<[1], [0], [0], [1], [0, 0, 1, 1], [], []>} : vector<16x16xbf16>, vector<16x8xbf16>, vector<16x8xf32> -> vector<16x8xf32>
    %45 = tpu.reciprocal %42 {approx = true} : vector<16x1xf32> -> vector<16x1xf32>
    %46 = vector.broadcast %45 : vector<16x1xf32> to vector<16x8xf32>
    %47 = arith.mulf %44, %46 : vector<16x8xf32>
    %48 = vector.extract_strided_slice %27 {offsets = [0, 8], sizes = [16, 8], strides = [1, 1]} : vector<16x96xf32> to vector<16x8xf32>
    %49 = arith.truncf %48 : vector<16x8xf32> to vector<16x8xbf16>
    %50 = vector.extract_strided_slice %27 {offsets = [0, 40], sizes = [16, 8], strides = [1, 1]} : vector<16x96xf32> to vector<16x8xf32>
    %51 = arith.truncf %50 : vector<16x8xf32> to vector<16x8xbf16>
    %52 = vector.extract_strided_slice %27 {offsets = [0, 72], sizes = [16, 8], strides = [1, 1]} : vector<16x96xf32> to vector<16x8xf32>
    %53 = arith.truncf %52 : vector<16x8xf32> to vector<16x8xbf16>
    %cst_17 = arith.constant dense<0.000000e+00> : vector<16x16xf32>
    %54 = tpu.matmul %49, %51, %cst_17 {dimension_numbers = #tpu.dot_dimension_numbers<[1], [1], [0], [0], [0, 0, 1, 0], [], []>} : vector<16x8xbf16>, vector<16x8xbf16>, vector<16x16xf32> -> vector<16x16xf32>
    %55 = arith.addf %54, %9 : vector<16x16xf32>
    %cst_18 = arith.constant dense<0xFF800000> : vector<16xf32>
    %56 = vector.multi_reduction <maximumf>, %55, %cst_18 [1] : vector<16x16xf32> to vector<16xf32>
    %57 = vector.shape_cast %56 : vector<16xf32> to vector<16x1xf32>
    %58 = vector.broadcast %57 : vector<16x1xf32> to vector<16x16xf32>
    %59 = arith.subf %55, %58 : vector<16x16xf32>
    %60 = math.exp %59 : vector<16x16xf32>
    %cst_19 = arith.constant dense<0.000000e+00> : vector<16xf32>
    %61 = vector.multi_reduction <add>, %60, %cst_19 [1] : vector<16x16xf32> to vector<16xf32>
    %62 = vector.shape_cast %61 : vector<16xf32> to vector<16x1xf32>
    %63 = arith.truncf %60 : vector<16x16xf32> to vector<16x16xbf16>
    %cst_20 = arith.constant dense<0.000000e+00> : vector<16x8xf32>
    %64 = tpu.matmul %63, %53, %cst_20 {dimension_numbers = #tpu.dot_dimension_numbers<[1], [0], [0], [1], [0, 0, 1, 1], [], []>} : vector<16x16xbf16>, vector<16x8xbf16>, vector<16x8xf32> -> vector<16x8xf32>
    %65 = tpu.reciprocal %62 {approx = true} : vector<16x1xf32> -> vector<16x1xf32>
    %66 = vector.broadcast %65 : vector<16x1xf32> to vector<16x8xf32>
    %67 = arith.mulf %64, %66 : vector<16x8xf32>
    %68 = vector.extract_strided_slice %27 {offsets = [0, 16], sizes = [16, 8], strides = [1, 1]} : vector<16x96xf32> to vector<16x8xf32>
    %69 = arith.truncf %68 : vector<16x8xf32> to vector<16x8xbf16>
    %70 = vector.extract_strided_slice %27 {offsets = [0, 48], sizes = [16, 8], strides = [1, 1]} : vector<16x96xf32> to vector<16x8xf32>
    %71 = arith.truncf %70 : vector<16x8xf32> to vector<16x8xbf16>
    %72 = vector.extract_strided_slice %27 {offsets = [0, 80], sizes = [16, 8], strides = [1, 1]} : vector<16x96xf32> to vector<16x8xf32>
    %73 = arith.truncf %72 : vector<16x8xf32> to vector<16x8xbf16>
    %cst_21 = arith.constant dense<0.000000e+00> : vector<16x16xf32>
    %74 = tpu.matmul %69, %71, %cst_21 {dimension_numbers = #tpu.dot_dimension_numbers<[1], [1], [0], [0], [0, 0, 1, 0], [], []>} : vector<16x8xbf16>, vector<16x8xbf16>, vector<16x16xf32> -> vector<16x16xf32>
    %75 = arith.addf %74, %9 : vector<16x16xf32>
    %cst_22 = arith.constant dense<0xFF800000> : vector<16xf32>
    %76 = vector.multi_reduction <maximumf>, %75, %cst_22 [1] : vector<16x16xf32> to vector<16xf32>
    %77 = vector.shape_cast %76 : vector<16xf32> to vector<16x1xf32>
    %78 = vector.broadcast %77 : vector<16x1xf32> to vector<16x16xf32>
    %79 = arith.subf %75, %78 : vector<16x16xf32>
    %80 = math.exp %79 : vector<16x16xf32>
    %cst_23 = arith.constant dense<0.000000e+00> : vector<16xf32>
    %81 = vector.multi_reduction <add>, %80, %cst_23 [1] : vector<16x16xf32> to vector<16xf32>
    %82 = vector.shape_cast %81 : vector<16xf32> to vector<16x1xf32>
    %83 = arith.truncf %80 : vector<16x16xf32> to vector<16x16xbf16>
    %cst_24 = arith.constant dense<0.000000e+00> : vector<16x8xf32>
    %84 = tpu.matmul %83, %73, %cst_24 {dimension_numbers = #tpu.dot_dimension_numbers<[1], [0], [0], [1], [0, 0, 1, 1], [], []>} : vector<16x16xbf16>, vector<16x8xbf16>, vector<16x8xf32> -> vector<16x8xf32>
    %85 = tpu.reciprocal %82 {approx = true} : vector<16x1xf32> -> vector<16x1xf32>
    %86 = vector.broadcast %85 : vector<16x1xf32> to vector<16x8xf32>
    %87 = arith.mulf %84, %86 : vector<16x8xf32>
    %88 = vector.extract_strided_slice %27 {offsets = [0, 24], sizes = [16, 8], strides = [1, 1]} : vector<16x96xf32> to vector<16x8xf32>
    %89 = arith.truncf %88 : vector<16x8xf32> to vector<16x8xbf16>
    %90 = vector.extract_strided_slice %27 {offsets = [0, 56], sizes = [16, 8], strides = [1, 1]} : vector<16x96xf32> to vector<16x8xf32>
    %91 = arith.truncf %90 : vector<16x8xf32> to vector<16x8xbf16>
    %92 = vector.extract_strided_slice %27 {offsets = [0, 88], sizes = [16, 8], strides = [1, 1]} : vector<16x96xf32> to vector<16x8xf32>
    %93 = arith.truncf %92 : vector<16x8xf32> to vector<16x8xbf16>
    %cst_25 = arith.constant dense<0.000000e+00> : vector<16x16xf32>
    %94 = tpu.matmul %89, %91, %cst_25 {dimension_numbers = #tpu.dot_dimension_numbers<[1], [1], [0], [0], [0, 0, 1, 0], [], []>} : vector<16x8xbf16>, vector<16x8xbf16>, vector<16x16xf32> -> vector<16x16xf32>
    %95 = arith.addf %94, %9 : vector<16x16xf32>
    %cst_26 = arith.constant dense<0xFF800000> : vector<16xf32>
    %96 = vector.multi_reduction <maximumf>, %95, %cst_26 [1] : vector<16x16xf32> to vector<16xf32>
    %97 = vector.shape_cast %96 : vector<16xf32> to vector<16x1xf32>
    %98 = vector.broadcast %97 : vector<16x1xf32> to vector<16x16xf32>
    %99 = arith.subf %95, %98 : vector<16x16xf32>
    %100 = math.exp %99 : vector<16x16xf32>
    %cst_27 = arith.constant dense<0.000000e+00> : vector<16xf32>
    %101 = vector.multi_reduction <add>, %100, %cst_27 [1] : vector<16x16xf32> to vector<16xf32>
    %102 = vector.shape_cast %101 : vector<16xf32> to vector<16x1xf32>
    %103 = arith.truncf %100 : vector<16x16xf32> to vector<16x16xbf16>
    %cst_28 = arith.constant dense<0.000000e+00> : vector<16x8xf32>
    %104 = tpu.matmul %103, %93, %cst_28 {dimension_numbers = #tpu.dot_dimension_numbers<[1], [0], [0], [1], [0, 0, 1, 1], [], []>} : vector<16x16xbf16>, vector<16x8xbf16>, vector<16x8xf32> -> vector<16x8xf32>
    %105 = tpu.reciprocal %102 {approx = true} : vector<16x1xf32> -> vector<16x1xf32>
    %106 = vector.broadcast %105 : vector<16x1xf32> to vector<16x8xf32>
    %107 = arith.mulf %104, %106 : vector<16x8xf32>
    %108 = tpu.concatenate %47, %67, %87, %107 in 1 : vector<16x8xf32>, vector<16x8xf32>, vector<16x8xf32>, vector<16x8xf32> -> vector<16x32xf32>
    %109 = arith.truncf %108 : vector<16x32xf32> to vector<16x32xbf16>
    %c0_29 = arith.constant 0 : index
    %c0_30 = arith.constant 0 : index
    %c0_31 = arith.constant 0 : index
    %110 = vector.load %arg5[%c0_29, %c0_30, %c0_31] : memref<1x32x32xbf16, #tpu.memory_space<vmem>>, vector<1x32x32xbf16>
    %111 = vector.shape_cast %110 : vector<1x32x32xbf16> to vector<32x32xbf16>
    %cst_32 = arith.constant dense<0.000000e+00> : vector<16x32xf32>
    %112 = tpu.matmul %109, %111, %cst_32 {dimension_numbers = #tpu.dot_dimension_numbers<[1], [0], [0], [1], [0, 0, 1, 1], [], []>} : vector<16x32xbf16>, vector<32x32xbf16>, vector<16x32xf32> -> vector<16x32xf32>
    %113 = arith.addf %3, %112 : vector<16x32xf32>
    %c0_33 = arith.constant 0 : index
    %c0_34 = arith.constant 0 : index
    %c0_35 = arith.constant 0 : index
    %114 = vector.load %arg6[%c0_33, %c0_34, %c0_35] : memref<1x1x32xf32, #tpu.memory_space<vmem>>, vector<1x1x32xf32>
    %115 = vector.shape_cast %114 : vector<1x1x32xf32> to vector<1x32xf32>
    %116 = arith.mulf %113, %113 : vector<16x32xf32>
    %cst_36 = arith.constant dense<0.000000e+00> : vector<16xf32>
    %117 = vector.multi_reduction <add>, %116, %cst_36 [1] : vector<16x32xf32> to vector<16xf32>
    %118 = vector.shape_cast %117 : vector<16xf32> to vector<16x1xf32>
    %cst_37 = arith.constant 3.200000e+01 : f32
    %119 = vector.broadcast %cst_37 : f32 to vector<16x1xf32>
    %120 = arith.divf %118, %119 : vector<16x1xf32>
    %cst_38 = arith.constant 9.99999974E-6 : f32
    %121 = vector.broadcast %cst_38 : f32 to vector<16x1xf32>
    %122 = arith.addf %120, %121 : vector<16x1xf32>
    %123 = math.rsqrt %122 : vector<16x1xf32>
    %124 = vector.broadcast %123 : vector<16x1xf32> to vector<16x32xf32>
    %125 = arith.mulf %113, %124 : vector<16x32xf32>
    %126 = vector.broadcast %115 : vector<1x32xf32> to vector<16x32xf32>
    %127 = arith.mulf %125, %126 : vector<16x32xf32>
    %128 = arith.truncf %127 : vector<16x32xf32> to vector<16x32xbf16>
    %c0_39 = arith.constant 0 : index
    %c0_40 = arith.constant 0 : index
    %c0_41 = arith.constant 0 : index
    %129 = vector.load %arg7[%c0_39, %c0_40, %c0_41] : memref<1x32x128xbf16, #tpu.memory_space<vmem>>, vector<1x32x128xbf16>
    %130 = vector.shape_cast %129 : vector<1x32x128xbf16> to vector<32x128xbf16>
    %cst_42 = arith.constant dense<0.000000e+00> : vector<16x128xf32>
    %131 = tpu.matmul %128, %130, %cst_42 {dimension_numbers = #tpu.dot_dimension_numbers<[1], [0], [0], [1], [0, 0, 1, 1], [], []>} : vector<16x32xbf16>, vector<32x128xbf16>, vector<16x128xf32> -> vector<16x128xf32>
    %132 = vector.extract_strided_slice %131 {offsets = [0, 0], sizes = [16, 64], strides = [1, 1]} : vector<16x128xf32> to vector<16x64xf32>
    %133 = vector.extract_strided_slice %131 {offsets = [0, 64], sizes = [16, 64], strides = [1, 1]} : vector<16x128xf32> to vector<16x64xf32>
    %134 = arith.negf %132 : vector<16x64xf32>
    %135 = math.exp %134 : vector<16x64xf32>
    %cst_43 = arith.constant 1.000000e+00 : f32
    %136 = vector.broadcast %cst_43 : f32 to vector<16x64xf32>
    %137 = arith.addf %136, %135 : vector<16x64xf32>
    %138 = arith.divf %136, %137 : vector<16x64xf32>
    %139 = arith.mulf %132, %138 : vector<16x64xf32>
    %140 = arith.mulf %139, %133 : vector<16x64xf32>
    %141 = arith.truncf %140 : vector<16x64xf32> to vector<16x64xbf16>
    %c0_44 = arith.constant 0 : index
    %c0_45 = arith.constant 0 : index
    %c0_46 = arith.constant 0 : index
    %142 = vector.load %arg8[%c0_44, %c0_45, %c0_46] : memref<1x64x32xbf16, #tpu.memory_space<vmem>>, vector<1x64x32xbf16>
    %143 = vector.shape_cast %142 : vector<1x64x32xbf16> to vector<64x32xbf16>
    %cst_47 = arith.constant dense<0.000000e+00> : vector<16x32xf32>
    %144 = tpu.matmul %141, %143, %cst_47 {dimension_numbers = #tpu.dot_dimension_numbers<[1], [0], [0], [1], [0, 0, 1, 1], [], []>} : vector<16x64xbf16>, vector<64x32xbf16>, vector<16x32xf32> -> vector<16x32xf32>
    %145 = arith.addf %113, %144 : vector<16x32xf32>
    %c0_48 = arith.constant 0 : index
    %c0_49 = arith.constant 0 : index
    %146 = vector.load %arg14[%c0_48, %c0_49] : memref<16x32xf32, #tpu.memory_space<vmem>>, vector<16x32xf32>
    tpu.vector_store %arg14[%c0_48, %c0_49], %145 {strides = array<i32>} : memref<16x32xf32, #tpu.memory_space<vmem>>, vector<16x32xf32>,
    %c1_i32 = arith.constant 1 : i32
    %147 = arith.cmpi eq, %arg1, %c1_i32 : i32
    %148 = arith.extui %147 : i1 to i32
    %c0_i32_50 = arith.constant 0 : i32
    %149 = arith.cmpi ne, %148, %c0_i32_50 : i32
    scf.if %149 {
      %c0_51 = arith.constant 0 : index
      %c0_52 = arith.constant 0 : index
      %150 = vector.load %arg9[%c0_51, %c0_52] : memref<1x32xf32, #tpu.memory_space<vmem>>, vector<1x32xf32>
      %151 = arith.mulf %145, %145 : vector<16x32xf32>
      %cst_53 = arith.constant dense<0.000000e+00> : vector<16xf32>
      %152 = vector.multi_reduction <add>, %151, %cst_53 [1] : vector<16x32xf32> to vector<16xf32>
      %153 = vector.shape_cast %152 : vector<16xf32> to vector<16x1xf32>
      %cst_54 = arith.constant 3.200000e+01 : f32
      %154 = vector.broadcast %cst_54 : f32 to vector<16x1xf32>
      %155 = arith.divf %153, %154 : vector<16x1xf32>
      %cst_55 = arith.constant 9.99999974E-6 : f32
      %156 = vector.broadcast %cst_55 : f32 to vector<16x1xf32>
      %157 = arith.addf %155, %156 : vector<16x1xf32>
      %158 = math.rsqrt %157 : vector<16x1xf32>
      %159 = vector.broadcast %158 : vector<16x1xf32> to vector<16x32xf32>
      %160 = arith.mulf %145, %159 : vector<16x32xf32>
      %161 = vector.broadcast %150 : vector<1x32xf32> to vector<16x32xf32>
      %162 = arith.mulf %160, %161 : vector<16x32xf32>
      %c0_56 = arith.constant 0 : index
      %c0_57 = arith.constant 0 : index
      %163 = vector.load %arg10[%c0_56, %c0_57] : memref<4x16xbf16, #tpu.memory_space<vmem>>, vector<4x16xbf16>
      %164 = arith.truncf %162 : vector<16x32xf32> to vector<16x32xbf16>
      %cst_58 = arith.constant dense<0.000000e+00> : vector<4x32xf32>
      %165 = tpu.matmul %163, %164, %cst_58 {dimension_numbers = #tpu.dot_dimension_numbers<[1], [0], [0], [1], [0, 0, 1, 1], [], []>} : vector<4x16xbf16>, vector<16x32xbf16>, vector<4x32xf32> -> vector<4x32xf32>
      %c0_59 = arith.constant 0 : index
      %c0_60 = arith.constant 0 : index
      %166 = vector.load %arg11[%c0_59, %c0_60] : memref<1x32xbf16, #tpu.memory_space<vmem>>, vector<1x32xbf16>
      %167 = arith.truncf %165 : vector<4x32xf32> to vector<4x32xbf16>
      %cst_61 = arith.constant dense<0.000000e+00> : vector<1x4xf32>
      %168 = tpu.matmul %166, %167, %cst_61 {dimension_numbers = #tpu.dot_dimension_numbers<[1], [1], [0], [0], [0, 0, 1, 0], [], []>} : vector<1x32xbf16>, vector<4x32xbf16>, vector<1x4xf32> -> vector<1x4xf32>
      %c0_62 = arith.constant 0 : index
      %c0_63 = arith.constant 0 : index
      %c0_64 = arith.constant 0 : index
      %169 = vector.load %arg12[%c0_62, %c0_63, %c0_64] : memref<1x4x32xf32, #tpu.memory_space<vmem>>, vector<1x4x32xf32>
      %170 = vector.shape_cast %169 : vector<1x4x32xf32> to vector<4x32xf32>
      %171 = vector.shape_cast %165 : vector<4x32xf32> to vector<1x4x32xf32>
      tpu.vector_store %arg12[%c0_62, %c0_63, %c0_64], %171 {strides = array<i32>} : memref<1x4x32xf32, #tpu.memory_space<vmem>>, vector<1x4x32xf32>,
      %c0_65 = arith.constant 0 : index
      %c0_66 = arith.constant 0 : index
      %c0_67 = arith.constant 0 : index
      %172 = vector.load %arg13[%c0_65, %c0_66, %c0_67] : memref<1x1x4xf32, #tpu.memory_space<vmem>>, vector<1x1x4xf32>
      %173 = vector.shape_cast %172 : vector<1x1x4xf32> to vector<1x4xf32>
      %174 = vector.shape_cast %168 : vector<1x4xf32> to vector<1x1x4xf32>
      tpu.vector_store %arg13[%c0_65, %c0_66, %c0_67], %174 {strides = array<i32>} : memref<1x1x4xf32, #tpu.memory_space<vmem>>, vector<1x1x4xf32>,
    } else {
    }
    return
  }
  func.func @transform_0(%arg0: i32, %arg1: i32) -> (i32, i32, i32) {
    %c0_i32 = arith.constant 0 : i32
    %c0_i32_0 = arith.constant 0 : i32
    %c0_i32_1 = arith.constant 0 : i32
    return %arg0, %c0_i32, %c0_i32_0 : i32, i32, i32
  }
  func.func @transform_1(%arg0: i32, %arg1: i32) -> (i32, i32, i32) {
    %c0_i32 = arith.constant 0 : i32
    %c0_i32_0 = arith.constant 0 : i32
    %c0_i32_1 = arith.constant 0 : i32
    return %arg1, %c0_i32, %c0_i32_0 : i32, i32, i32
  }
  func.func @transform_2(%arg0: i32, %arg1: i32) -> (i32, i32, i32) {
    %c0_i32 = arith.constant 0 : i32
    %c0_i32_0 = arith.constant 0 : i32
    %c0_i32_1 = arith.constant 0 : i32
    return %arg1, %c0_i32, %c0_i32_0 : i32, i32, i32
  }
  func.func @transform_3(%arg0: i32, %arg1: i32) -> (i32, i32, i32) {
    %c0_i32 = arith.constant 0 : i32
    %c0_i32_0 = arith.constant 0 : i32
    %c0_i32_1 = arith.constant 0 : i32
    return %arg1, %c0_i32, %c0_i32_0 : i32, i32, i32
  }
  func.func @transform_4(%arg0: i32, %arg1: i32) -> (i32, i32, i32) {
    %c0_i32 = arith.constant 0 : i32
    %c0_i32_0 = arith.constant 0 : i32
    %c0_i32_1 = arith.constant 0 : i32
    return %arg1, %c0_i32, %c0_i32_0 : i32, i32, i32
  }
  func.func @transform_5(%arg0: i32, %arg1: i32) -> (i32, i32, i32) {
    %c0_i32 = arith.constant 0 : i32
    %c0_i32_0 = arith.constant 0 : i32
    %c0_i32_1 = arith.constant 0 : i32
    return %arg1, %c0_i32, %c0_i32_0 : i32, i32, i32
  }
  func.func @transform_6(%arg0: i32, %arg1: i32) -> (i32, i32, i32) {
    %c0_i32 = arith.constant 0 : i32
    %c0_i32_0 = arith.constant 0 : i32
    %c0_i32_1 = arith.constant 0 : i32
    return %arg1, %c0_i32, %c0_i32_0 : i32, i32, i32
  }
  func.func @transform_7(%arg0: i32, %arg1: i32) -> (i32, i32) {
    %c0_i32 = arith.constant 0 : i32
    %c0_i32_0 = arith.constant 0 : i32
    %c0_i32_1 = arith.constant 0 : i32
    return %c0_i32, %c0_i32_0 : i32, i32
  }
  func.func @transform_8(%arg0: i32, %arg1: i32) -> (i32, i32) {
    %c0_i32 = arith.constant 0 : i32
    %c0_i32_0 = arith.constant 0 : i32
    %c0_i32_1 = arith.constant 0 : i32
    return %c0_i32, %c0_i32_0 : i32, i32
  }
  func.func @transform_9(%arg0: i32, %arg1: i32) -> (i32, i32) {
    %c0_i32 = arith.constant 0 : i32
    %c0_i32_0 = arith.constant 0 : i32
    %c0_i32_1 = arith.constant 0 : i32
    return %c0_i32, %c0_i32_0 : i32, i32
  }
  func.func @transform_10(%arg0: i32, %arg1: i32) -> (i32, i32, i32) {
    %c0_i32 = arith.constant 0 : i32
    %c0_i32_0 = arith.constant 0 : i32
    %c0_i32_1 = arith.constant 0 : i32
    return %arg0, %c0_i32, %c0_i32_0 : i32, i32, i32
  }
  func.func @transform_11(%arg0: i32, %arg1: i32) -> (i32, i32, i32) {
    %c0_i32 = arith.constant 0 : i32
    %c0_i32_0 = arith.constant 0 : i32
    %c0_i32_1 = arith.constant 0 : i32
    return %arg0, %c0_i32, %c0_i32_0 : i32, i32, i32
  }
}

</mosaic_0001>

<llo_original>
// kernel: tpu_custom_call.1
$region0: #{tpu_custom_call.1}
  #allocation0 [shape = 'u32[]', space=smem, size = 0x4, offset = 0x4, fixed_abs, tag = 'smem constant byte address 0x4 - core index']
  #allocation1 [shape = 'u32[144,128]{1,0:T(1,128)}', space=vmem, size = 0x12000, scoped, tag = 'internal scratch']
  #allocation2 [shape = 'f32[16,32]{1,0:T(8,128)}', space=vmem, size = 0x2000, scoped, tag = 'scratch operand']
  %s0 = inlined_call_operand.vmem [shape: f32[2,16,32], index: 0, kind: input, shape index: {}]
  %s1 = inlined_call_operand.hbm [shape: f32[2,1,32], index: 1, kind: input, shape index: {}]
  %s2 = inlined_call_operand.vmem [shape: bf16[2,32,96], index: 2, kind: input, shape index: {}]
  %s3 = inlined_call_operand.vmem [shape: bf16[2,32,32], index: 3, kind: input, shape index: {}]
  %s4 = inlined_call_operand.vmem [shape: f32[2,1,32], index: 4, kind: input, shape index: {}]
  %s5 = inlined_call_operand.hbm [shape: bf16[2,32,128], index: 5, kind: input, shape index: {}]
  %s6 = inlined_call_operand.vmem [shape: bf16[2,64,32], index: 6, kind: input, shape index: {}]
  %s7 = inlined_call_operand.vmem [shape: f32[1,32], index: 7, kind: input, shape index: {}]
  %s8 = inlined_call_operand.vmem [shape: bf16[4,16], index: 8, kind: input, shape index: {}]
  %s9 = inlined_call_operand.vmem [shape: bf16[1,32], index: 9, kind: input, shape index: {}]
  %s10 = inlined_call_operand.hbm [shape: f32[2,4,32], index: 10, kind: output, shape index: {0}]
  %s11 = inlined_call_operand.hbm [shape: f32[2,1,4], index: 11, kind: output, shape index: {1}]
  %12 = xla_tuple %s10, %s11
  %s13 = sld [smem:[#allocation0]]
  $region97: #{tpu_custom_call.1} parent=0
    _
  %s15 = ssub.s32 1, %s13
  %s16 = scalar_select 0, %s15, %s13
  $region1: #{tpu_custom_call.1} parent=0
    #allocation3 [shape = 'u8[1024]{0}', space=vmem, size = 0x400, scoped, tag = 'input window, operand 1']
    #allocation4 [shape = 's32[2]{0}', space=sflag, size = 0x8, scoped, tag = 'scoped memory for tpu_custom_call.1']
    #allocation5 [shape = 's32[2]{0}', space=sflag, size = 0x8, scoped, tag = 'scoped memory for tpu_custom_call.1']
    #allocation6 [shape = 'u8[16384]{0}', space=vmem, size = 0x4000, scoped, tag = 'input window, operand 5']
    #allocation7 [shape = 's32[2]{0}', space=sflag, size = 0x8, scoped, tag = 'scoped memory for tpu_custom_call.1']
    #allocation8 [shape = 'u8[4096]{0}', space=vmem, size = 0x1000, scoped, tag = 'output window, operand 0']
    #allocation9 [shape = 'u8[1024]{0}', space=vmem, size = 0x400, scoped, tag = 'output window, operand 1']
    #allocation10 [shape = 's32[2]{0}', space=sflag, size = 0x8, scoped, tag = 'scoped memory for tpu_custom_call.1']
    %17 = vsyncpa [#allocation4], 0
    %s18 = scalar_lea.sflag [#allocation4], 1
    %19 = vsyncpa %s18, 0
    %20 = vsyncpa [#allocation7], 0
    %s21 = scalar_lea.sflag [#allocation7], 1
    %22 = vsyncpa %s21, 0
    %23 = vsyncpa [#allocation5], 0
    %s24 = scalar_lea.sflag [#allocation5], 1
    %25 = vsyncpa %s24, 0
    %26 = vsyncpa [#allocation10], 0
    %s27 = scalar_lea.sflag [#allocation10], 1
    %28 = vsyncpa %s27, 0
    loop: start=0, step=1, limit=6
    $region2: #{tpu_custom_call.1} parent=1 // loop_pre_header
      _
    $region3: #{tpu_custom_call.1} parent=1 // loop_header
      %s30 = sphi 0, %s34
      %p31 = scmp.ge.s32.totalorder %s30, 6
      %s37 = sphi 0, %s49
      %s38 = sphi 0, %s45
      %s39 = sphi 0, %s37
      %s40 = sphi 0, %s38
      %s41 = sphi 0, %s39
      %s42 = sphi 0, %s40
      %s52 = sphi 0, %s54
      %s55 = sphi 0, %s52
      %s56 = sphi 0, %s55
      %s72 = sphi 0, %s56
      %s78 = sphi 0, %s80
      %s81 = sphi 0, %s78
      %s82 = sphi 0, %s81
      %s98 = sphi 0, %s82
      %s104 = sphi 0, %s106
      %s107 = sphi 0, %s104
      %s108 = sphi 0, %s107
      %s124 = sphi 0, %s108
      %s130 = sphi 0, %s132
      %s133 = sphi 0, %s130
      %s134 = sphi 0, %s133
      %s150 = sphi 0, %s134
      %s156 = sphi 0, %s158
      %s159 = sphi 0, %s156
      %s160 = sphi 0, %s159
      %s176 = sphi 0, %s160
      %s182 = sphi 0, %s184
      %s185 = sphi 0, %s182
      %s186 = sphi 0, %s185
      %s202 = sphi 0, %s186
      %s208 = sphi 0, %s210
      %s211 = sphi 0, %s208
      %s212 = sphi 0, %s211
      %s228 = sphi 0, %s212
      %s232 = sphi 0, %s232
      %s234 = sphi 0, %s232
      %s235 = sphi 0, %s234
      %s249 = sphi 0, %s235
      %s253 = sphi 0, %s253
      %s255 = sphi 0, %s253
      %s256 = sphi 0, %s255
      %s270 = sphi 0, %s256
      %s274 = sphi 0, %s274
      %s276 = sphi 0, %s274
      %s277 = sphi 0, %s276
      %s291 = sphi 0, %s277
      %s297 = sphi 0, %s299
      %s300 = sphi 0, %s297
      %s301 = sphi 0, %s300
      %s317 = sphi 0, %s301
      %s323 = sphi 0, %s325
      %s326 = sphi 0, %s323
      %s327 = sphi 0, %s326
      %s343 = sphi 0, %s327
    $region4: #{tpu_custom_call.1} parent=1 // loop_header_branch
      %33 = sbr.rel (%p31) target = $region8
    $region5: #{tpu_custom_call.1} parent=1 // loop_body
      %s35 = ssub.s32 %s30, 1
      %s36 = ssub.s32 %s30, 2
      %s43 = sadd.s32 1, %s38
      %p44 = scmp.ge.s32.totalorder %s43, 2
      %s45 = scalar_select %p44, 0, %s43
      %s46 = sadd.s32 1, %s37
      %s47 = scalar_select %p44, %s46, %s37
      %p48 = scmp.ge.s32.totalorder %s47, 2
      %s49 = scalar_select %p48, 0, %s47
      %s50 = ssub.s32 %s37, %s49
      %p51 = scmp.eq.s32.totalorder %s50, 0
      %s53 = sadd.s32 %s52, 1
      %s54 = scalar_select %p51, %s52, %s53
      %p57 = pneg %p51
      %p58 = scmp.eq.s32.totalorder %s30, 3
      %p59 = por %p57, %p58
      %p60 = scmp.ne.s32.totalorder %s52, %s55
      %p61 = scmp.eq.s32.totalorder %s30, 0
      %p62 = por %p60, %p61
      %p63 = scmp.ne.s32.totalorder %s52, %s55
      %p64 = scmp.eq.s32.totalorder %s35, 3
      %p65 = por %p63, %p64
      %p66 = scmp.ne.s32.totalorder %s55, %s56
      %p67 = scmp.eq.s32.totalorder %s35, 0
      %p68 = por %p66, %p67
      %p69 = scmp.ne.s32.totalorder %s55, %s56
      %p70 = scmp.eq.s32.totalorder %s36, 3
      %p71 = por %p69, %p70
      %p73 = scmp.ne.s32.totalorder %s56, %s72
      %p74 = scmp.eq.s32.totalorder %s36, 0
      %p75 = por %p73, %p74
      %s76 = ssub.s32 %s38, %s45
      %p77 = scmp.eq.s32.totalorder %s76, 0
      %s79 = sadd.s32 %s78, 1
      %s80 = scalar_select %p77, %s78, %s79
      %p83 = pneg %p77
      %p84 = scmp.eq.s32.totalorder %s30, 3
      %p85 = por %p83, %p84
      %p86 = scmp.ne.s32.totalorder %s78, %s81
      %p87 = scmp.eq.s32.totalorder %s30, 0
      %p88 = por %p86, %p87
      %p89 = scmp.ne.s32.totalorder %s78, %s81
      %p90 = scmp.eq.s32.totalorder %s35, 3
      %p91 = por %p89, %p90
      %p92 = scmp.ne.s32.totalorder %s81, %s82
      %p93 = scmp.eq.s32.totalorder %s35, 0
      %p94 = por %p92, %p93
      %p95 = scmp.ne.s32.totalorder %s81, %s82
      %p96 = scmp.eq.s32.totalorder %s36, 3
      %p97 = por %p95, %p96
      %p99 = scmp.ne.s32.totalorder %s82, %s98
      %p100 = scmp.eq.s32.totalorder %s36, 0
      %p101 = por %p99, %p100
      %s102 = ssub.s32 %s38, %s45
      %p103 = scmp.eq.s32.totalorder %s102, 0
      %s105 = sadd.s32 %s104, 1
      %s106 = scalar_select %p103, %s104, %s105
      %p109 = pneg %p103
      %p110 = scmp.eq.s32.totalorder %s30, 3
      %p111 = por %p109, %p110
      %p112 = scmp.ne.s32.totalorder %s104, %s107
      %p113 = scmp.eq.s32.totalorder %s30, 0
      %p114 = por %p112, %p113
      %p115 = scmp.ne.s32.totalorder %s104, %s107
      %p116 = scmp.eq.s32.totalorder %s35, 3
      %p117 = por %p115, %p116
      %p118 = scmp.ne.s32.totalorder %s107, %s108
      %p119 = scmp.eq.s32.totalorder %s35, 0
      %p120 = por %p118, %p119
      %p121 = scmp.ne.s32.totalorder %s107, %s108
      %p122 = scmp.eq.s32.totalorder %s36, 3
      %p123 = por %p121, %p122
      %p125 = scmp.ne.s32.totalorder %s108, %s124
      %p126 = scmp.eq.s32.totalorder %s36, 0
      %p127 = por %p125, %p126
      %s128 = ssub.s32 %s38, %s45
      %p129 = scmp.eq.s32.totalorder %s128, 0
      %s131 = sadd.s32 %s130, 1
      %s132 = scalar_select %p129, %s130, %s131
      %p135 = pneg %p129
      %p136 = scmp.eq.s32.totalorder %s30, 3
      %p137 = por %p135, %p136
      %p138 = scmp.ne.s32.totalorder %s130, %s133
      %p139 = scmp.eq.s32.totalorder %s30, 0
      %p140 = por %p138, %p139
      %p141 = scmp.ne.s32.totalorder %s130, %s133
      %p142 = scmp.eq.s32.totalorder %s35, 3
      %p143 = por %p141, %p142
      %p144 = scmp.ne.s32.totalorder %s133, %s134
      %p145 = scmp.eq.s32.totalorder %s35, 0
      %p146 = por %p144, %p145
      %p147 = scmp.ne.s32.totalorder %s133, %s134
      %p148 = scmp.eq.s32.totalorder %s36, 3
      %p149 = por %p147, %p148
      %p151 = scmp.ne.s32.totalorder %s134, %s150
      %p152 = scmp.eq.s32.totalorder %s36, 0
      %p153 = por %p151, %p152
      %s154 = ssub.s32 %s38, %s45
      %p155 = scmp.eq.s32.totalorder %s154, 0
      %s157 = sadd.s32 %s156, 1
      %s158 = scalar_select %p155, %s156, %s157
      %p161 = pneg %p155
      %p162 = scmp.eq.s32.totalorder %s30, 3
      %p163 = por %p161, %p162
      %p164 = scmp.ne.s32.totalorder %s156, %s159
      %p165 = scmp.eq.s32.totalorder %s30, 0
      %p166 = por %p164, %p165
      %p167 = scmp.ne.s32.totalorder %s156, %s159
      %p168 = scmp.eq.s32.totalorder %s35, 3
      %p169 = por %p167, %p168
      %p170 = scmp.ne.s32.totalorder %s159, %s160
      %p171 = scmp.eq.s32.totalorder %s35, 0
      %p172 = por %p170, %p171
      %p173 = scmp.ne.s32.totalorder %s159, %s160
      %p174 = scmp.eq.s32.totalorder %s36, 3
      %p175 = por %p173, %p174
      %p177 = scmp.ne.s32.totalorder %s160, %s176
      %p178 = scmp.eq.s32.totalorder %s36, 0
      %p179 = por %p177, %p178
      %s180 = ssub.s32 %s38, %s45
      %p181 = scmp.eq.s32.totalorder %s180, 0
      %s183 = sadd.s32 %s182, 1
      %s184 = scalar_select %p181, %s182, %s183
      %p187 = pneg %p181
      %p188 = scmp.eq.s32.totalorder %s30, 3
      %p189 = por %p187, %p188
      %p190 = scmp.ne.s32.totalorder %s182, %s185
      %p191 = scmp.eq.s32.totalorder %s30, 0
      %p192 = por %p190, %p191
      %p193 = scmp.ne.s32.totalorder %s182, %s185
      %p194 = scmp.eq.s32.totalorder %s35, 3
      %p195 = por %p193, %p194
      %p196 = scmp.ne.s32.totalorder %s185, %s186
      %p197 = scmp.eq.s32.totalorder %s35, 0
      %p198 = por %p196, %p197
      %p199 = scmp.ne.s32.totalorder %s185, %s186
      %p200 = scmp.eq.s32.totalorder %s36, 3
      %p201 = por %p199, %p200
      %p203 = scmp.ne.s32.totalorder %s186, %s202
      %p204 = scmp.eq.s32.totalorder %s36, 0
      %p205 = por %p203, %p204
      %s206 = ssub.s32 %s38, %s45
      %p207 = scmp.eq.s32.totalorder %s206, 0
      %s209 = sadd.s32 %s208, 1
      %s210 = scalar_select %p207, %s208, %s209
      %p213 = pneg %p207
      %p214 = scmp.eq.s32.totalorder %s30, 3
      %p215 = por %p213, %p214
      %p216 = scmp.ne.s32.totalorder %s208, %s211
      %p217 = scmp.eq.s32.totalorder %s30, 0
      %p218 = por %p216, %p217
      %p219 = scmp.ne.s32.totalorder %s208, %s211
      %p220 = scmp.eq.s32.totalorder %s35, 3
      %p221 = por %p219, %p220
      %p222 = scmp.ne.s32.totalorder %s211, %s212
      %p223 = scmp.eq.s32.totalorder %s35, 0
      %p224 = por %p222, %p223
      %p225 = scmp.ne.s32.totalorder %s211, %s212
      %p226 = scmp.eq.s32.totalorder %s36, 3
      %p227 = por %p225, %p226
      %p229 = scmp.ne.s32.totalorder %s212, %s228
      %p230 = scmp.eq.s32.totalorder %s36, 0
      %p231 = por %p229, %p230
      %s233 = sadd.s32 %s232, 1
      %p236 = scmp.eq.s32.totalorder %s30, 3
      %p237 = scmp.ne.s32.totalorder %s232, %s234
      %p238 = scmp.eq.s32.totalorder %s30, 0
      %p239 = por %p237, %p238
      %p240 = scmp.ne.s32.totalorder %s232, %s234
      %p241 = scmp.eq.s32.totalorder %s35, 3
      %p242 = por %p240, %p241
      %p243 = scmp.ne.s32.totalorder %s234, %s235
      %p244 = scmp.eq.s32.totalorder %s35, 0
      %p245 = por %p243, %p244
      %p246 = scmp.ne.s32.totalorder %s234, %s235
      %p247 = scmp.eq.s32.totalorder %s36, 3
      %p248 = por %p246, %p247
      %p250 = scmp.ne.s32.totalorder %s235, %s249
      %p251 = scmp.eq.s32.totalorder %s36, 0
      %p252 = por %p250, %p251
      %s254 = sadd.s32 %s253, 1
      %p257 = scmp.eq.s32.totalorder %s30, 3
      %p258 = scmp.ne.s32.totalorder %s253, %s255
      %p259 = scmp.eq.s32.totalorder %s30, 0
      %p260 = por %p258, %p259
      %p261 = scmp.ne.s32.totalorder %s253, %s255
      %p262 = scmp.eq.s32.totalorder %s35, 3
      %p263 = por %p261, %p262
      %p264 = scmp.ne.s32.totalorder %s255, %s256
      %p265 = scmp.eq.s32.totalorder %s35, 0
      %p266 = por %p264, %p265
      %p267 = scmp.ne.s32.totalorder %s255, %s256
      %p268 = scmp.eq.s32.totalorder %s36, 3
      %p269 = por %p267, %p268
      %p271 = scmp.ne.s32.totalorder %s256, %s270
      %p272 = scmp.eq.s32.totalorder %s36, 0
      %p273 = por %p271, %p272
      %s275 = sadd.s32 %s274, 1
      %p278 = scmp.eq.s32.totalorder %s30, 3
      %p279 = scmp.ne.s32.totalorder %s274, %s276
      %p280 = scmp.eq.s32.totalorder %s30, 0
      %p281 = por %p279, %p280
      %p282 = scmp.ne.s32.totalorder %s274, %s276
      %p283 = scmp.eq.s32.totalorder %s35, 3
      %p284 = por %p282, %p283
      %p285 = scmp.ne.s32.totalorder %s276, %s277
      %p286 = scmp.eq.s32.totalorder %s35, 0
      %p287 = por %p285, %p286
      %p288 = scmp.ne.s32.totalorder %s276, %s277
      %p289 = scmp.eq.s32.totalorder %s36, 3
      %p290 = por %p288, %p289
      %p292 = scmp.ne.s32.totalorder %s277, %s291
      %p293 = scmp.eq.s32.totalorder %s36, 0
      %p294 = por %p292, %p293
      %s295 = ssub.s32 %s37, %s49
      %p296 = scmp.eq.s32.totalorder %s295, 0
      %s298 = sadd.s32 %s297, 1
      %s299 = scalar_select %p296, %s297, %s298
      %p302 = pneg %p296
      %p303 = scmp.eq.s32.totalorder %s30, 3
      %p304 = por %p302, %p303
      %p305 = scmp.ne.s32.totalorder %s297, %s300
      %p306 = scmp.eq.s32.totalorder %s30, 0
      %p307 = por %p305, %p306
      %p308 = scmp.ne.s32.totalorder %s297, %s300
      %p309 = scmp.eq.s32.totalorder %s35, 3
      %p310 = por %p308, %p309
      %p311 = scmp.ne.s32.totalorder %s300, %s301
      %p312 = scmp.eq.s32.totalorder %s35, 0
      %p313 = por %p311, %p312
      %p314 = scmp.ne.s32.totalorder %s300, %s301
      %p315 = scmp.eq.s32.totalorder %s36, 3
      %p316 = por %p314, %p315
      %p318 = scmp.ne.s32.totalorder %s301, %s317
      %p319 = scmp.eq.s32.totalorder %s36, 0
      %p320 = por %p318, %p319
      %s321 = ssub.s32 %s37, %s49
      %p322 = scmp.eq.s32.totalorder %s321, 0
      %s324 = sadd.s32 %s323, 1
      %s325 = scalar_select %p322, %s323, %s324
      %p328 = pneg %p322
      %p329 = scmp.eq.s32.totalorder %s30, 3
      %p330 = por %p328, %p329
      %p331 = scmp.ne.s32.totalorder %s323, %s326
      %p332 = scmp.eq.s32.totalorder %s30, 0
      %p333 = por %p331, %p332
      %p334 = scmp.ne.s32.totalorder %s323, %s326
      %p335 = scmp.eq.s32.totalorder %s35, 3
      %p336 = por %p334, %p335
      %p337 = scmp.ne.s32.totalorder %s326, %s327
      %p338 = scmp.eq.s32.totalorder %s35, 0
      %p339 = por %p337, %p338
      %p340 = scmp.ne.s32.totalorder %s326, %s327
      %p341 = scmp.eq.s32.totalorder %s36, 3
      %p342 = por %p340, %p341
      %p344 = scmp.ne.s32.totalorder %s327, %s343
      %p345 = scmp.eq.s32.totalorder %s36, 0
      %p346 = por %p344, %p345
      %p347 = scmp.le.s32.totalorder 1, %s30
      %p348 = scmp.lt.s32.totalorder %s30, 5
      %p349 = pnand %p347, %p348
      %p350 = pneg %p349
      // Predicated region
      $region9: #{tpu_custom_call.1} parent=5 // pred_check
        _
      $region10: #{tpu_custom_call.1} parent=5 // pred_check_branch
        %352 = sbr.rel (%p349) target = $region12
      $region11: #{tpu_custom_call.1} parent=5 // pred_region
        %s353 = ssub.s32 %s30, 1
        // Predicated region
        $region13: #{tpu_custom_call.1} parent=11 // pred_check
          %p354 = pneg %p245
        $region14: #{tpu_custom_call.1} parent=11 // pred_check_branch
          %356 = sbr.rel (%p354) target = $region16
        $region15: #{tpu_custom_call.1} parent=11 // pred_region
          _
        $region16: #{tpu_custom_call.1} parent=11 // pred_fallthru
          _
        // Predicated region
        $region17: #{tpu_custom_call.1} parent=11 // pred_check
          %p357 = pneg %p266
        $region18: #{tpu_custom_call.1} parent=11 // pred_check_branch
          %359 = sbr.rel (%p357) target = $region20
        $region19: #{tpu_custom_call.1} parent=11 // pred_region
          _
        $region20: #{tpu_custom_call.1} parent=11 // pred_fallthru
          _
        // Predicated region
        $region21: #{tpu_custom_call.1} parent=11 // pred_check
          %p360 = pneg %p287
        $region22: #{tpu_custom_call.1} parent=11 // pred_check_branch
          %362 = sbr.rel (%p360) target = $region24
        $region23: #{tpu_custom_call.1} parent=11 // pred_region
          _
        $region24: #{tpu_custom_call.1} parent=11 // pred_fallthru
          _
      $region12: #{tpu_custom_call.1} parent=5 // pred_fallthru
        _
      %p363 = scmp.lt.s32.totalorder %s30, 4
      // Predicated region
      $region25: #{tpu_custom_call.1} parent=5 // pred_check
        %p364 = pneg %p363
      $region26: #{tpu_custom_call.1} parent=5 // pred_check_branch
        %366 = sbr.rel (%p364) target = $region28
      $region27: #{tpu_custom_call.1} parent=5 // pred_region
        // Predicated region
        $region29: #{tpu_custom_call.1} parent=27 // pred_check
          %p367 = pneg %p62
        $region30: #{tpu_custom_call.1} parent=27 // pred_check_branch
          %369 = sbr.rel (%p367) target = $region32
        $region31: #{tpu_custom_call.1} parent=27 // pred_region
          %p370 = scmp.lt.s32.totalorder %s37, 1
          %s371 = scalar_select %p370, %s37, 1
          %s372 = smul.addr %s371, 2
          %s373 = smul.addr %s372, 8
          %s374 = scalar_lea.vmem %s0, %s373
        $region32: #{tpu_custom_call.1} parent=27 // pred_fallthru
          _
        // Predicated region
        $region33: #{tpu_custom_call.1} parent=27 // pred_check
          %p375 = pneg %p88
        $region34: #{tpu_custom_call.1} parent=27 // pred_check_branch
          %377 = sbr.rel (%p375) target = $region36
        $region35: #{tpu_custom_call.1} parent=27 // pred_region
          %s378 = sand.u32 %s78, 1
          %s379 = scalar_lea.sflag [#allocation4], %s378
          %s380 = sand.u32 %s78, 1
          %s381 = scalar_lea.vmem [#allocation3], %s380
          %s383 = ssub.s32 16, 16
          %384 = vsyncadd %s379, %s383
          %s385 = smul.addr %s38, 16
          %s386 = scalar_lea.hbm %s1, %s385
          %s388 = sshll.u32 %s381, 4
          %s389 = int_to_ptr.vmem [resolvable:$true] %s388
          %391 = dma.hbm_to_vmem [thread:$0]  %s386, 16, %s389, %s379
        $region36: #{tpu_custom_call.1} parent=27 // pred_fallthru
          _
        // Predicated region
        $region37: #{tpu_custom_call.1} parent=27 // pred_check
          %p392 = pneg %p114
        $region38: #{tpu_custom_call.1} parent=27 // pred_check_branch
          %394 = sbr.rel (%p392) target = $region40
        $region39: #{tpu_custom_call.1} parent=27 // pred_region
          %p395 = scmp.lt.s32.totalorder %s38, 1
          %s396 = scalar_select %p395, %s38, 1
          %s397 = smul.addr %s396, 4
          %s398 = smul.addr %s397, 4
          %s399 = scalar_lea.vmem %s2, %s398
        $region40: #{tpu_custom_call.1} parent=27 // pred_fallthru
          _
        // Predicated region
        $region41: #{tpu_custom_call.1} parent=27 // pred_check
          %p400 = pneg %p140
        $region42: #{tpu_custom_call.1} parent=27 // pred_check_branch
          %402 = sbr.rel (%p400) target = $region44
        $region43: #{tpu_custom_call.1} parent=27 // pred_region
          %p403 = scmp.lt.s32.totalorder %s38, 1
          %s404 = scalar_select %p403, %s38, 1
          %s405 = smul.addr %s404, 4
          %s406 = smul.addr %s405, 4
          %s407 = scalar_lea.vmem %s3, %s406
        $region44: #{tpu_custom_call.1} parent=27 // pred_fallthru
          _
        // Predicated region
        $region45: #{tpu_custom_call.1} parent=27 // pred_check
          %p408 = pneg %p166
        $region46: #{tpu_custom_call.1} parent=27 // pred_check_branch
          %410 = sbr.rel (%p408) target = $region48
        $region47: #{tpu_custom_call.1} parent=27 // pred_region
          %p411 = scmp.lt.s32.totalorder %s38, 1
          %s412 = scalar_select %p411, %s38, 1
          %s413 = scalar_lea.vmem %s4, %s412
        $region48: #{tpu_custom_call.1} parent=27 // pred_fallthru
          _
        // Predicated region
        $region49: #{tpu_custom_call.1} parent=27 // pred_check
          %p414 = pneg %p192
        $region50: #{tpu_custom_call.1} parent=27 // pred_check_branch
          %416 = sbr.rel (%p414) target = $region52
        $region51: #{tpu_custom_call.1} parent=27 // pred_region
          %s417 = sand.u32 %s182, 1
          %s418 = scalar_lea.sflag [#allocation7], %s417
          %s419 = sand.u32 %s182, 1
          %s420 = smul.addr %s419, 16
          %s421 = scalar_lea.vmem [#allocation6], %s420
          %s423 = ssub.s32 256, 256
          %424 = vsyncadd %s418, %s423
          %s425 = smul.addr %s38, 4
          %s426 = smul.addr %s425, 64
          %s427 = scalar_lea.hbm %s5, %s426
          %s428 = sshll.u32 %s421, 4
          %s429 = int_to_ptr.vmem [resolvable:$true] %s428
          %434 = dma.hbm_to_vmem [thread:$0]  %s427, 256, %s429, %s418, 64, 64, 4
        $region52: #{tpu_custom_call.1} parent=27 // pred_fallthru
          _
        // Predicated region
        $region53: #{tpu_custom_call.1} parent=27 // pred_check
          %p435 = pneg %p218
        $region54: #{tpu_custom_call.1} parent=27 // pred_check_branch
          %437 = sbr.rel (%p435) target = $region56
        $region55: #{tpu_custom_call.1} parent=27 // pred_region
          %p438 = scmp.lt.s32.totalorder %s38, 1
          %s439 = scalar_select %p438, %s38, 1
          %s440 = smul.addr %s439, 8
          %s441 = smul.addr %s440, 4
          %s442 = scalar_lea.vmem %s6, %s441
        $region56: #{tpu_custom_call.1} parent=27 // pred_fallthru
          _
      $region28: #{tpu_custom_call.1} parent=5 // pred_fallthru
        _
      %p443 = scmp.le.s32.totalorder 1, %s30
      %p444 = scmp.lt.s32.totalorder %s30, 5
      %p445 = pnand %p443, %p444
      %p446 = pneg %p445
      // Predicated region
      $region57: #{tpu_custom_call.1} parent=5 // pred_check
        _
      $region58: #{tpu_custom_call.1} parent=5 // pred_check_branch
        %448 = sbr.rel (%p445) target = $region60
      $region59: #{tpu_custom_call.1} parent=5 // pred_region
        %s449 = ssub.s32 %s30, 1
        %s450 = sand.u32 %s81, 1
        %s451 = scalar_lea.sflag [#allocation4], %s450
        %s452 = sand.u32 %s81, 1
        %s453 = scalar_lea.vmem [#allocation3], %s452
        // Predicated region
        $region61: #{tpu_custom_call.1} parent=59 // pred_check
          %p454 = pneg %p94
        $region62: #{tpu_custom_call.1} parent=59 // pred_check_branch
          %456 = sbr.rel (%p454) target = $region64
        $region63: #{tpu_custom_call.1} parent=59 // pred_region
          %457 = dma.done %s451, 16
        $region64: #{tpu_custom_call.1} parent=59 // pred_fallthru
          _
        %s458 = sand.u32 %s185, 1
        %s459 = scalar_lea.sflag [#allocation7], %s458
        %s460 = sand.u32 %s185, 1
        %s461 = smul.addr %s460, 16
        %s462 = scalar_lea.vmem [#allocation6], %s461
        // Predicated region
        $region65: #{tpu_custom_call.1} parent=59 // pred_check
          %p463 = pneg %p198
        $region66: #{tpu_custom_call.1} parent=59 // pred_check_branch
          %465 = sbr.rel (%p463) target = $region68
        $region67: #{tpu_custom_call.1} parent=59 // pred_region
          %466 = dma.done %s459, 256
        $region68: #{tpu_custom_call.1} parent=59 // pred_fallthru
          _
        %p467 = scmp.lt.s32.totalorder %s39, 1
        %s468 = scalar_select %p467, %s39, 1
        %s469 = smul.addr %s468, 2
        %s470 = smul.addr %s469, 8
        %s471 = scalar_lea.vmem %s0, %s470
        %p472 = pneg %p68
        %p473 = pneg %p65
        %s474 = sand.u32 %s81, 1
        %s475 = scalar_lea.sflag [#allocation4], %s474
        %s476 = sand.u32 %s81, 1
        %s477 = scalar_lea.vmem [#allocation3], %s476
        %p478 = pneg %p94
        %p479 = pneg %p91
        %p480 = scmp.lt.s32.totalorder %s40, 1
        %s481 = scalar_select %p480, %s40, 1
        %s482 = smul.addr %s481, 4
        %s483 = smul.addr %s482, 4
        %s484 = scalar_lea.vmem %s2, %s483
        %p485 = pneg %p120
        %p486 = pneg %p117
        %p487 = scmp.lt.s32.totalorder %s40, 1
        %s488 = scalar_select %p487, %s40, 1
        %s489 = smul.addr %s488, 4
        %s490 = smul.addr %s489, 4
        %s491 = scalar_lea.vmem %s3, %s490
        %p492 = pneg %p146
        %p493 = pneg %p143
        %p494 = scmp.lt.s32.totalorder %s40, 1
        %s495 = scalar_select %p494, %s40, 1
        %s496 = scalar_lea.vmem %s4, %s495
        %p497 = pneg %p172
        %p498 = pneg %p169
        %s499 = sand.u32 %s185, 1
        %s500 = scalar_lea.sflag [#allocation7], %s499
        %s501 = sand.u32 %s185, 1
        %s502 = smul.addr %s501, 16
        %s503 = scalar_lea.vmem [#allocation6], %s502
        %p504 = pneg %p198
        %p505 = pneg %p195
        %p506 = scmp.lt.s32.totalorder %s40, 1
        %s507 = scalar_select %p506, %s40, 1
        %s508 = smul.addr %s507, 8
        %s509 = smul.addr %s508, 4
        %s510 = scalar_lea.vmem %s6, %s509
        %p511 = pneg %p224
        %p512 = pneg %p221
        %p513 = pneg %p245
        %p514 = pneg %p242
        %p515 = pneg %p266
        %p516 = pneg %p263
        %p517 = pneg %p287
        %p518 = pneg %p284
        %p519 = pneg %p313
        %p520 = pneg %p310
        %s521 = sand.u32 %s300, 1
        %s522 = scalar_lea.sflag [#allocation5], %s521
        %s523 = sand.u32 %s300, 1
        %s524 = smul.addr %s523, 4
        %s525 = scalar_lea.vmem [#allocation8], %s524
        %p526 = pneg %p339
        %p527 = pneg %p336
        %s528 = sand.u32 %s326, 1
        %s529 = scalar_lea.sflag [#allocation10], %s528
        %s530 = sand.u32 %s326, 1
        %s531 = scalar_lea.vmem [#allocation9], %s530
        %p532 = scmp.lt.s32.totalorder %s39, 1
        %s533 = scalar_select %p532, %s39, 1
        %s534 = smul.addr %s533, 2
        %s535 = smul.addr %s534, 8
        %s536 = scalar_lea.vmem %s0, %s535
        %p537 = scmp.lt.s32.totalorder %s40, 1
        %s538 = scalar_select %p537, %s40, 1
        %s539 = smul.addr %s538, 4
        %s540 = smul.addr %s539, 4
        %s541 = scalar_lea.vmem %s2, %s540
        %p542 = scmp.lt.s32.totalorder %s40, 1
        %s543 = scalar_select %p542, %s40, 1
        %s544 = smul.addr %s543, 4
        %s545 = smul.addr %s544, 4
        %s546 = scalar_lea.vmem %s3, %s545
        %p547 = scmp.lt.s32.totalorder %s40, 1
        %s548 = scalar_select %p547, %s40, 1
        %s549 = scalar_lea.vmem %s4, %s548
        %p550 = scmp.lt.s32.totalorder %s40, 1
        %s551 = scalar_select %p550, %s40, 1
        %s552 = smul.addr %s551, 8
        %s553 = smul.addr %s552, 4
        %s554 = scalar_lea.vmem %s6, %s553
        %p556 = scmp.eq.s32.totalorder %s40, 0
        // Predicated region
        $region69: #{tpu_custom_call.1} parent=59 // pred_check
          %p557 = pneg %p556
        $region70: #{tpu_custom_call.1} parent=59 // pred_check_branch
          %559 = sbr.rel (%p557) target = $region72
        $region71: #{tpu_custom_call.1} parent=59 // pred_region
          %v560 = vld [vmem:[%s536] sm:$0xff]
          %v561 = vld [vmem:[%s536 + $0x8] sm:$0xff]
          %vm562 = vcmask 261120
          %563 = vst.msk [vmem:[#allocation2] sm:$0xff] %vm562, %v560
          %564 = vst.msk [vmem:[#allocation2 + $0x8] sm:$0xff] %vm562, %v561
        $region72: #{tpu_custom_call.1} parent=59 // pred_fallthru
          _
        %v565 = vld [vmem:[#allocation2] sm:$0xff]
        %v566 = vld [vmem:[#allocation2 + $0x8] sm:$0xff]
        %v567 = vlaneseq
        %v568 = vshrl.u32 %v567, 7
        %v569 = vadd.s32 %v568, 8
        %v570 = vlaneseq
        %v571 = vand.u32 %v570, 127
        %vm572 = vcmp.le.s32.totalorder %v571, %v568
        %vm573 = vcmp.le.s32.totalorder %v571, %v569
        %v574 = vsel %vm572, 0.0, -1e+30
        %v575 = vsel %vm573, 0.0, -1e+30
        %v576 = vld [vmem:[%s453] sm:$0x1]
        %v577 = vmul.f32 %v565, %v565
        %v578 = vmul.f32 %v566, %v566
        %vm579 = vcmask 261120
        %v580 = vsel %vm579, %v577, 0.0
        %581 = vadd.xlane.f32.xlu0 %v580
        %v582 = vpop.xlane.xlu0 %581
        %v583 = vsel %vm579, %v578, 0.0
        %584 = vadd.xlane.f32.xlu0 %v583
        %v585 = vpop.xlane.xlu0 %584
        %v586 = vrcp.pop 32.0
        %v587 = vmul.f32 %v582, %v586
        %v588 = vmul.f32 %v585, %v586
        %v589 = vadd.f32 %v587, 1e-05
        %v590 = vadd.f32 %v588, 1e-05
        %v591 = vrsqrt.pop %v589
        %v592 = vrsqrt.pop %v590
        %v593 = vmul.f32 %v565, %v591
        %v594 = vmul.f32 %v566, %v592
        %v596 = vlaneseq
        %v597 = vshrl.u32 %v596, 7
        %v598 = vsub.s32 0, %v597
        %v599 = vrot.slane %v576, %v598
        %v601 = vmul.f32 %v593, %v599
        %v602 = vmul.f32 %v594, %v599
        %v603 = vpack.c.bf16 %v602, %v601
        %v604 = vld [vmem:[%s541] sm:$0xf]
        %v605 = vld [vmem:[%s541 + $0x4] sm:$0xf]
        %v606 = vld [vmem:[%s541 + $0x8] sm:$0xf]
        %v607 = vld [vmem:[%s541 + $0xc] sm:$0xf]
        %v612 = vunpack.c.l.b16 %v604
        %v613 = vunpack.c.l.b16 %v605
        %v614 = vunpack.c.l.b16 %v606
        %v615 = vunpack.c.l.b16 %v607
        %v616 = vpack.c.b16 %v613, %v612
        %v617 = vpack.c.b16 %v615, %v614
        %v621 = vsel %vm579, %v603, 0
        %623 = vmatprep.subr.bf16.mxu0 0
        %624 = vmatpush1.bf16.msra.mxu0 0
        %625 = vmatprep.subr.bf16.mxu0 0
        %626 = vmatpush1.bf16.msra.mxu0 0
        %627 = vmatprep.subr.bf16.mxu0 0
        %628 = vmatpush1.bf16.msra.mxu0 0
        %629 = vmatprep.subr.bf16.mxu0 0
        %630 = vmatpush1.bf16.msra.mxu0 0
        %631 = vmatprep.subr.bf16.mxu0 0
        %632 = vmatpush1.bf16.msra.mxu0 0
        %633 = vmatprep.subr.bf16.mxu0 0
        %634 = vmatpush1.bf16.msra.mxu0 0
        %635 = vmatprep.subr.bf16.mxu0 0
        %636 = vmatpush1.bf16.msra.mxu0 %v617
        %637 = vmatprep.subr.bf16.mxu0 0
        %638 = vmatpush1.bf16.msra.mxu0 %v616
        %639 = vmatprep.subr.bf16.mxu0 0
        %640 = vmatpush2.bf16.msra.mxu0 0
        %641 = vmatprep.subr.bf16.mxu0 0
        %642 = vmatpush2.bf16.msra.mxu0 0
        %643 = vmatprep.subr.bf16.mxu0 0
        %644 = vmatpush2.bf16.msra.mxu0 0
        %645 = vmatprep.subr.bf16.mxu0 0
        %646 = vmatpush2.bf16.msra.mxu0 0
        %647 = vmatprep.subr.bf16.mxu0 0
        %648 = vmatpush2.bf16.msra.mxu0 0
        %649 = vmatprep.subr.bf16.mxu0 0
        %650 = vmatpush2.bf16.msra.mxu0 0
        %651 = vmatprep.subr.bf16.mxu0 0
        %652 = vmatpush2.bf16.msra.mxu0 0
        %653 = vmatprep.subr.bf16.mxu0 0
        %654 = vmatpush2.bf16.msra.mxu0 0
        %655 = vmatprep.mubr.bf16.mxu0 0
        %656 = vmatmul.mubr.bf16.gmra.mxu0 %v621
        %v657 = vpop.f32.mrf.mxu0
        %v658 = vadd.f32 0.0, %v657
        %v659 = vpop.f32.mrf.mxu0
        %v660 = vpop.f32.mrf.mxu0
        %v661 = vadd.f32 0.0, %v660
        %v662 = vpop.f32.mrf.mxu0
        %663 = vdwg.mxu0
        %v664 = vpack.c.bf16 %v661, %v658
        %666 = vrot.lane.b32.xlu0 %v664, 96
        %v667 = vpop.permute.xlu0 %666
        %vm668 = vcmask 64512
        %v670 = vsel %vm668, %v664, 0
        %v673 = vsel %vm668, %v667, 0
        %675 = vmatprep.subr.bf16.mxu0 0
        %676 = vmatpush1.bf16.xpose.msra.mxu0 0
        %677 = vmatprep.subr.bf16.mxu0 0
        %678 = vmatpush1.bf16.xpose.msra.mxu0 0
        %679 = vmatprep.subr.bf16.mxu0 0
        %680 = vmatpush1.bf16.xpose.msra.mxu0 0
        %681 = vmatprep.subr.bf16.mxu0 0
        %682 = vmatpush1.bf16.xpose.msra.mxu0 0
        %683 = vmatprep.subr.bf16.mxu0 0
        %684 = vmatpush1.bf16.xpose.msra.mxu0 0
        %685 = vmatprep.subr.bf16.mxu0 0
        %686 = vmatpush1.bf16.xpose.msra.mxu0 0
        %687 = vmatprep.subr.bf16.mxu0 0
        %688 = vmatpush1.bf16.xpose.msra.mxu0 0
        %689 = vmatprep.subr.bf16.mxu0 0
        %690 = vmatpush1.bf16.xpose.msra.mxu0 %v673
        %691 = vmatprep.subr.bf16.mxu0 0
        %692 = vmatpush2.bf16.xpose.msra.mxu0 0
        %693 = vmatprep.subr.bf16.mxu0 0
        %694 = vmatpush2.bf16.xpose.msra.mxu0 0
        %695 = vmatprep.subr.bf16.mxu0 0
        %696 = vmatpush2.bf16.xpose.msra.mxu0 0
        %697 = vmatprep.subr.bf16.mxu0 0
        %698 = vmatpush2.bf16.xpose.msra.mxu0 0
        %699 = vmatprep.subr.bf16.mxu0 0
        %700 = vmatpush2.bf16.xpose.msra.mxu0 0
        %701 = vmatprep.subr.bf16.mxu0 0
        %702 = vmatpush2.bf16.xpose.msra.mxu0 0
        %703 = vmatprep.subr.bf16.mxu0 0
        %704 = vmatpush2.bf16.xpose.msra.mxu0 0
        %705 = vmatprep.subr.bf16.mxu0 0
        %706 = vmatpush2.bf16.xpose.msra.mxu0 0
        %707 = vmatprep.mubr.bf16.mxu0 0
        %708 = vmatmul.mubr.bf16.gmra.mxu0 %v670
        %v709 = vpop.f32.mrf.mxu0
        %v710 = vadd.f32 %v574, %v709
        %v711 = vpop.f32.mrf.mxu0
        %v712 = vpop.f32.mrf.mxu0
        %v713 = vadd.f32 %v575, %v712
        %v714 = vpop.f32.mrf.mxu0
        %715 = vdwg.mxu0
        %vm716 = vcmask 130048
        %v717 = vsel %vm716, %v710, -inf
        %718 = vmax.xlane.f32.xlu0 %v717
        %v719 = vpop.xlane.xlu0 %718
        %v720 = vsel %vm716, %v713, -inf
        %721 = vmax.xlane.f32.xlu0 %v720
        %v722 = vpop.xlane.xlu0 %721
        %v723 = vsub.f32 %v710, %v719
        %v724 = vsub.f32 %v713, %v722
        %v725 = vmul.f32 %v723, 1.442695
        %v726 = vpow.pop %v725
        %v727 = vmul.f32 %v724, 1.442695
        %v728 = vpow.pop %v727
        %v729 = vsel %vm716, %v726, 0.0
        %730 = vadd.xlane.f32.xlu0 %v729
        %v731 = vpop.xlane.xlu0 %730
        %v732 = vsel %vm716, %v728, 0.0
        %733 = vadd.xlane.f32.xlu0 %v732
        %v734 = vpop.xlane.xlu0 %733
        %v735 = vpack.c.bf16 %v728, %v726
        %736 = vrot.lane.b32.xlu0 %v664, 64
        %v737 = vpop.permute.xlu0 %736
        %v740 = vsel %vm716, %v735, 0
        %742 = vmatprep.subr.bf16.mxu0 0
        %743 = vmatpush1.bf16.msra.mxu0 0
        %744 = vmatprep.subr.bf16.mxu0 0
        %745 = vmatpush1.bf16.msra.mxu0 0
        %746 = vmatprep.subr.bf16.mxu0 0
        %747 = vmatpush1.bf16.msra.mxu0 0
        %748 = vmatprep.subr.bf16.mxu0 0
        %749 = vmatpush1.bf16.msra.mxu0 0
        %750 = vmatprep.subr.bf16.mxu0 0
        %751 = vmatpush1.bf16.msra.mxu0 0
        %752 = vmatprep.subr.bf16.mxu0 0
        %753 = vmatpush1.bf16.msra.mxu0 0
        %754 = vmatprep.subr.bf16.mxu0 0
        %755 = vmatpush1.bf16.msra.mxu0 0
        %756 = vmatprep.subr.bf16.mxu0 0
        %757 = vmatpush1.bf16.msra.mxu0 %v737
        %758 = vmatprep.subr.bf16.mxu0 0
        %759 = vmatpush2.bf16.msra.mxu0 0
        %760 = vmatprep.subr.bf16.mxu0 0
        %761 = vmatpush2.bf16.msra.mxu0 0
        %762 = vmatprep.subr.bf16.mxu0 0
        %763 = vmatpush2.bf16.msra.mxu0 0
        %764 = vmatprep.subr.bf16.mxu0 0
        %765 = vmatpush2.bf16.msra.mxu0 0
        %766 = vmatprep.subr.bf16.mxu0 0
        %767 = vmatpush2.bf16.msra.mxu0 0
        %768 = vmatprep.subr.bf16.mxu0 0
        %769 = vmatpush2.bf16.msra.mxu0 0
        %770 = vmatprep.subr.bf16.mxu0 0
        %771 = vmatpush2.bf16.msra.mxu0 0
        %772 = vmatprep.subr.bf16.mxu0 0
        %773 = vmatpush2.bf16.msra.mxu0 0
        %774 = vmatprep.mubr.bf16.mxu0 0
        %775 = vmatmul.mubr.bf16.gmra.mxu0 %v740
        %v776 = vpop.f32.mrf.mxu0
        %v777 = vadd.f32 0.0, %v776
        %v778 = vpop.f32.mrf.mxu0
        %v779 = vpop.f32.mrf.mxu0
        %v780 = vadd.f32 0.0, %v779
        %v781 = vpop.f32.mrf.mxu0
        %782 = vdwg.mxu0
        %v783 = vrcp.pop %v731
        %v784 = vrcp.pop %v734
        %v785 = vmul.f32 %v777, %v783
        %v786 = vmul.f32 %v780, %v784
        %787 = vrot.lane.b32.xlu0 %v664, 120
        %v788 = vpop.permute.xlu0 %787
        %789 = vrot.lane.b32.xlu0 %v664, 88
        %v790 = vpop.permute.xlu0 %789
        %v792 = vsel %vm668, %v788, 0
        %v795 = vsel %vm668, %v790, 0
        %797 = vmatprep.subr.bf16.mxu0 0
        %798 = vmatpush1.bf16.xpose.msra.mxu0 0
        %799 = vmatprep.subr.bf16.mxu0 0
        %800 = vmatpush1.bf16.xpose.msra.mxu0 0
        %801 = vmatprep.subr.bf16.mxu0 0
        %802 = vmatpush1.bf16.xpose.msra.mxu0 0
        %803 = vmatprep.subr.bf16.mxu0 0
        %804 = vmatpush1.bf16.xpose.msra.mxu0 0
        %805 = vmatprep.subr.bf16.mxu0 0
        %806 = vmatpush1.bf16.xpose.msra.mxu0 0
        %807 = vmatprep.subr.bf16.mxu0 0
        %808 = vmatpush1.bf16.xpose.msra.mxu0 0
        %809 = vmatprep.subr.bf16.mxu0 0
        %810 = vmatpush1.bf16.xpose.msra.mxu0 0
        %811 = vmatprep.subr.bf16.mxu0 0
        %812 = vmatpush1.bf16.xpose.msra.mxu0 %v795
        %813 = vmatprep.subr.bf16.mxu0 0
        %814 = vmatpush2.bf16.xpose.msra.mxu0 0
        %815 = vmatprep.subr.bf16.mxu0 0
        %816 = vmatpush2.bf16.xpose.msra.mxu0 0
        %817 = vmatprep.subr.bf16.mxu0 0
        %818 = vmatpush2.bf16.xpose.msra.mxu0 0
        %819 = vmatprep.subr.bf16.mxu0 0
        %820 = vmatpush2.bf16.xpose.msra.mxu0 0
        %821 = vmatprep.subr.bf16.mxu0 0
        %822 = vmatpush2.bf16.xpose.msra.mxu0 0
        %823 = vmatprep.subr.bf16.mxu0 0
        %824 = vmatpush2.bf16.xpose.msra.mxu0 0
        %825 = vmatprep.subr.bf16.mxu0 0
        %826 = vmatpush2.bf16.xpose.msra.mxu0 0
        %827 = vmatprep.subr.bf16.mxu0 0
        %828 = vmatpush2.bf16.xpose.msra.mxu0 0
        %829 = vmatprep.mubr.bf16.mxu0 0
        %830 = vmatmul.mubr.bf16.gmra.mxu0 %v792
        %v831 = vpop.f32.mrf.mxu0
        %v832 = vadd.f32 %v574, %v831
        %v833 = vpop.f32.mrf.mxu0
        %v834 = vpop.f32.mrf.mxu0
        %v835 = vadd.f32 %v575, %v834
        %v836 = vpop.f32.mrf.mxu0
        %837 = vdwg.mxu0
        %v838 = vsel %vm716, %v832, -inf
        %839 = vmax.xlane.f32.xlu0 %v838
        %v840 = vpop.xlane.xlu0 %839
        %v841 = vsel %vm716, %v835, -inf
        %842 = vmax.xlane.f32.xlu0 %v841
        %v843 = vpop.xlane.xlu0 %842
        %v844 = vsub.f32 %v832, %v840
        %v845 = vsub.f32 %v835, %v843
        %v846 = vmul.f32 %v844, 1.442695
        %v847 = vpow.pop %v846
        %v848 = vmul.f32 %v845, 1.442695
        %v849 = vpow.pop %v848
        %v850 = vsel %vm716, %v847, 0.0
        %851 = vadd.xlane.f32.xlu0 %v850
        %v852 = vpop.xlane.xlu0 %851
        %v853 = vsel %vm716, %v849, 0.0
        %854 = vadd.xlane.f32.xlu0 %v853
        %v855 = vpop.xlane.xlu0 %854
        %v856 = vpack.c.bf16 %v849, %v847
        %857 = vrot.lane.b32.xlu0 %v664, 56
        %v858 = vpop.permute.xlu0 %857
        %v861 = vsel %vm716, %v856, 0
        %863 = vmatprep.subr.bf16.mxu0 0
        %864 = vmatpush1.bf16.msra.mxu0 0
        %865 = vmatprep.subr.bf16.mxu0 0
        %866 = vmatpush1.bf16.msra.mxu0 0
        %867 = vmatprep.subr.bf16.mxu0 0
        %868 = vmatpush1.bf16.msra.mxu0 0
        %869 = vmatprep.subr.bf16.mxu0 0
        %870 = vmatpush1.bf16.msra.mxu0 0
        %871 = vmatprep.subr.bf16.mxu0 0
        %872 = vmatpush1.bf16.msra.mxu0 0
        %873 = vmatprep.subr.bf16.mxu0 0
        %874 = vmatpush1.bf16.msra.mxu0 0
        %875 = vmatprep.subr.bf16.mxu0 0
        %876 = vmatpush1.bf16.msra.mxu0 0
        %877 = vmatprep.subr.bf16.mxu0 0
        %878 = vmatpush1.bf16.msra.mxu0 %v858
        %879 = vmatprep.subr.bf16.mxu0 0
        %880 = vmatpush2.bf16.msra.mxu0 0
        %881 = vmatprep.subr.bf16.mxu0 0
        %882 = vmatpush2.bf16.msra.mxu0 0
        %883 = vmatprep.subr.bf16.mxu0 0
        %884 = vmatpush2.bf16.msra.mxu0 0
        %885 = vmatprep.subr.bf16.mxu0 0
        %886 = vmatpush2.bf16.msra.mxu0 0
        %887 = vmatprep.subr.bf16.mxu0 0
        %888 = vmatpush2.bf16.msra.mxu0 0
        %889 = vmatprep.subr.bf16.mxu0 0
        %890 = vmatpush2.bf16.msra.mxu0 0
        %891 = vmatprep.subr.bf16.mxu0 0
        %892 = vmatpush2.bf16.msra.mxu0 0
        %893 = vmatprep.subr.bf16.mxu0 0
        %894 = vmatpush2.bf16.msra.mxu0 0
        %895 = vmatprep.mubr.bf16.mxu0 0
        %896 = vmatmul.mubr.bf16.gmra.mxu0 %v861
        %v897 = vpop.f32.mrf.mxu0
        %v898 = vadd.f32 0.0, %v897
        %v899 = vpop.f32.mrf.mxu0
        %v900 = vpop.f32.mrf.mxu0
        %v901 = vadd.f32 0.0, %v900
        %v902 = vpop.f32.mrf.mxu0
        %903 = vdwg.mxu0
        %v904 = vrcp.pop %v852
        %v905 = vrcp.pop %v855
        %v906 = vmul.f32 %v898, %v904
        %v907 = vmul.f32 %v901, %v905
        %908 = vrot.lane.b32.xlu0 %v664, 112
        %v909 = vpop.permute.xlu0 %908
        %910 = vrot.lane.b32.xlu0 %v664, 80
        %v911 = vpop.permute.xlu0 %910
        %v913 = vsel %vm668, %v909, 0
        %v916 = vsel %vm668, %v911, 0
        %918 = vmatprep.subr.bf16.mxu0 0
        %919 = vmatpush1.bf16.xpose.msra.mxu0 0
        %920 = vmatprep.subr.bf16.mxu0 0
        %921 = vmatpush1.bf16.xpose.msra.mxu0 0
        %922 = vmatprep.subr.bf16.mxu0 0
        %923 = vmatpush1.bf16.xpose.msra.mxu0 0
        %924 = vmatprep.subr.bf16.mxu0 0
        %925 = vmatpush1.bf16.xpose.msra.mxu0 0
        %926 = vmatprep.subr.bf16.mxu0 0
        %927 = vmatpush1.bf16.xpose.msra.mxu0 0
        %928 = vmatprep.subr.bf16.mxu0 0
        %929 = vmatpush1.bf16.xpose.msra.mxu0 0
        %930 = vmatprep.subr.bf16.mxu0 0
        %931 = vmatpush1.bf16.xpose.msra.mxu0 0
        %932 = vmatprep.subr.bf16.mxu0 0
        %933 = vmatpush1.bf16.xpose.msra.mxu0 %v916
        %934 = vmatprep.subr.bf16.mxu0 0
        %935 = vmatpush2.bf16.xpose.msra.mxu0 0
        %936 = vmatprep.subr.bf16.mxu0 0
        %937 = vmatpush2.bf16.xpose.msra.mxu0 0
        %938 = vmatprep.subr.bf16.mxu0 0
        %939 = vmatpush2.bf16.xpose.msra.mxu0 0
        %940 = vmatprep.subr.bf16.mxu0 0
        %941 = vmatpush2.bf16.xpose.msra.mxu0 0
        %942 = vmatprep.subr.bf16.mxu0 0
        %943 = vmatpush2.bf16.xpose.msra.mxu0 0
        %944 = vmatprep.subr.bf16.mxu0 0
        %945 = vmatpush2.bf16.xpose.msra.mxu0 0
        %946 = vmatprep.subr.bf16.mxu0 0
        %947 = vmatpush2.bf16.xpose.msra.mxu0 0
        %948 = vmatprep.subr.bf16.mxu0 0
        %949 = vmatpush2.bf16.xpose.msra.mxu0 0
        %950 = vmatprep.mubr.bf16.mxu0 0
        %951 = vmatmul.mubr.bf16.gmra.mxu0 %v913
        %v952 = vpop.f32.mrf.mxu0
        %v953 = vadd.f32 %v574, %v952
        %v954 = vpop.f32.mrf.mxu0
        %v955 = vpop.f32.mrf.mxu0
        %v956 = vadd.f32 %v575, %v955
        %v957 = vpop.f32.mrf.mxu0
        %958 = vdwg.mxu0
        %v959 = vsel %vm716, %v953, -inf
        %960 = vmax.xlane.f32.xlu0 %v959
        %v961 = vpop.xlane.xlu0 %960
        %v962 = vsel %vm716, %v956, -inf
        %963 = vmax.xlane.f32.xlu0 %v962
        %v964 = vpop.xlane.xlu0 %963
        %v965 = vsub.f32 %v953, %v961
        %v966 = vsub.f32 %v956, %v964
        %v967 = vmul.f32 %v965, 1.442695
        %v968 = vpow.pop %v967
        %v969 = vmul.f32 %v966, 1.442695
        %v970 = vpow.pop %v969
        %v971 = vsel %vm716, %v968, 0.0
        %972 = vadd.xlane.f32.xlu0 %v971
        %v973 = vpop.xlane.xlu0 %972
        %v974 = vsel %vm716, %v970, 0.0
        %975 = vadd.xlane.f32.xlu0 %v974
        %v976 = vpop.xlane.xlu0 %975
        %v977 = vpack.c.bf16 %v970, %v968
        %978 = vrot.lane.b32.xlu0 %v664, 48
        %v979 = vpop.permute.xlu0 %978
        %v982 = vsel %vm716, %v977, 0
        %984 = vmatprep.subr.bf16.mxu0 0
        %985 = vmatpush1.bf16.msra.mxu0 0
        %986 = vmatprep.subr.bf16.mxu0 0
        %987 = vmatpush1.bf16.msra.mxu0 0
        %988 = vmatprep.subr.bf16.mxu0 0
        %989 = vmatpush1.bf16.msra.mxu0 0
        %990 = vmatprep.subr.bf16.mxu0 0
        %991 = vmatpush1.bf16.msra.mxu0 0
        %992 = vmatprep.subr.bf16.mxu0 0
        %993 = vmatpush1.bf16.msra.mxu0 0
        %994 = vmatprep.subr.bf16.mxu0 0
        %995 = vmatpush1.bf16.msra.mxu0 0
        %996 = vmatprep.subr.bf16.mxu0 0
        %997 = vmatpush1.bf16.msra.mxu0 0
        %998 = vmatprep.subr.bf16.mxu0 0
        %999 = vmatpush1.bf16.msra.mxu0 %v979
        %1000 = vmatprep.subr.bf16.mxu0 0
        %1001 = vmatpush2.bf16.msra.mxu0 0
        %1002 = vmatprep.subr.bf16.mxu0 0
        %1003 = vmatpush2.bf16.msra.mxu0 0
        %1004 = vmatprep.subr.bf16.mxu0 0
        %1005 = vmatpush2.bf16.msra.mxu0 0
        %1006 = vmatprep.subr.bf16.mxu0 0
        %1007 = vmatpush2.bf16.msra.mxu0 0
        %1008 = vmatprep.subr.bf16.mxu0 0
        %1009 = vmatpush2.bf16.msra.mxu0 0
        %1010 = vmatprep.subr.bf16.mxu0 0
        %1011 = vmatpush2.bf16.msra.mxu0 0
        %1012 = vmatprep.subr.bf16.mxu0 0
        %1013 = vmatpush2.bf16.msra.mxu0 0
        %1014 = vmatprep.subr.bf16.mxu0 0
        %1015 = vmatpush2.bf16.msra.mxu0 0
        %1016 = vmatprep.mubr.bf16.mxu0 0
        %1017 = vmatmul.mubr.bf16.gmra.mxu0 %v982
        %v1018 = vpop.f32.mrf.mxu0
        %v1019 = vadd.f32 0.0, %v1018
        %v1020 = vpop.f32.mrf.mxu0
        %v1021 = vpop.f32.mrf.mxu0
        %v1022 = vadd.f32 0.0, %v1021
        %v1023 = vpop.f32.mrf.mxu0
        %1024 = vdwg.mxu0
        %v1025 = vrcp.pop %v973
        %v1026 = vrcp.pop %v976
        %v1027 = vmul.f32 %v1019, %v1025
        %v1028 = vmul.f32 %v1022, %v1026
        %1029 = vrot.lane.b32.xlu0 %v664, 104
        %v1030 = vpop.permute.xlu0 %1029
        %1031 = vrot.lane.b32.xlu0 %v664, 72
        %v1032 = vpop.permute.xlu0 %1031
        %v1034 = vsel %vm668, %v1030, 0
        %v1037 = vsel %vm668, %v1032, 0
        %1039 = vmatprep.subr.bf16.mxu0 0
        %1040 = vmatpush1.bf16.xpose.msra.mxu0 0
        %1041 = vmatprep.subr.bf16.mxu0 0
        %1042 = vmatpush1.bf16.xpose.msra.mxu0 0
        %1043 = vmatprep.subr.bf16.mxu0 0
        %1044 = vmatpush1.bf16.xpose.msra.mxu0 0
        %1045 = vmatprep.subr.bf16.mxu0 0
        %1046 = vmatpush1.bf16.xpose.msra.mxu0 0
        %1047 = vmatprep.subr.bf16.mxu0 0
        %1048 = vmatpush1.bf16.xpose.msra.mxu0 0
        %1049 = vmatprep.subr.bf16.mxu0 0
        %1050 = vmatpush1.bf16.xpose.msra.mxu0 0
        %1051 = vmatprep.subr.bf16.mxu0 0
        %1052 = vmatpush1.bf16.xpose.msra.mxu0 0
        %1053 = vmatprep.subr.bf16.mxu0 0
        %1054 = vmatpush1.bf16.xpose.msra.mxu0 %v1037
        %1055 = vmatprep.subr.bf16.mxu0 0
        %1056 = vmatpush2.bf16.xpose.msra.mxu0 0
        %1057 = vmatprep.subr.bf16.mxu0 0
        %1058 = vmatpush2.bf16.xpose.msra.mxu0 0
        %1059 = vmatprep.subr.bf16.mxu0 0
        %1060 = vmatpush2.bf16.xpose.msra.mxu0 0
        %1061 = vmatprep.subr.bf16.mxu0 0
        %1062 = vmatpush2.bf16.xpose.msra.mxu0 0
        %1063 = vmatprep.subr.bf16.mxu0 0
        %1064 = vmatpush2.bf16.xpose.msra.mxu0 0
        %1065 = vmatprep.subr.bf16.mxu0 0
        %1066 = vmatpush2.bf16.xpose.msra.mxu0 0
        %1067 = vmatprep.subr.bf16.mxu0 0
        %1068 = vmatpush2.bf16.xpose.msra.mxu0 0
        %1069 = vmatprep.subr.bf16.mxu0 0
        %1070 = vmatpush2.bf16.xpose.msra.mxu0 0
        %1071 = vmatprep.mubr.bf16.mxu0 0
        %1072 = vmatmul.mubr.bf16.gmra.mxu0 %v1034
        %v1073 = vpop.f32.mrf.mxu0
        %v1074 = vadd.f32 %v574, %v1073
        %v1075 = vpop.f32.mrf.mxu0
        %v1076 = vpop.f32.mrf.mxu0
        %v1077 = vadd.f32 %v575, %v1076
        %v1078 = vpop.f32.mrf.mxu0
        %1079 = vdwg.mxu0
        %v1080 = vsel %vm716, %v1074, -inf
        %1081 = vmax.xlane.f32.xlu0 %v1080
        %v1082 = vpop.xlane.xlu0 %1081
        %v1083 = vsel %vm716, %v1077, -inf
        %1084 = vmax.xlane.f32.xlu0 %v1083
        %v1085 = vpop.xlane.xlu0 %1084
        %v1086 = vsub.f32 %v1074, %v1082
        %v1087 = vsub.f32 %v1077, %v1085
        %v1088 = vmul.f32 %v1086, 1.442695
        %v1089 = vpow.pop %v1088
        %v1090 = vmul.f32 %v1087, 1.442695
        %v1091 = vpow.pop %v1090
        %v1092 = vsel %vm716, %v1089, 0.0
        %1093 = vadd.xlane.f32.xlu0 %v1092
        %v1094 = vpop.xlane.xlu0 %1093
        %v1095 = vsel %vm716, %v1091, 0.0
        %1096 = vadd.xlane.f32.xlu0 %v1095
        %v1097 = vpop.xlane.xlu0 %1096
        %v1098 = vpack.c.bf16 %v1091, %v1089
        %1099 = vrot.lane.b32.xlu0 %v664, 40
        %v1100 = vpop.permute.xlu0 %1099
        %v1103 = vsel %vm716, %v1098, 0
        %1105 = vmatprep.subr.bf16.mxu0 0
        %1106 = vmatpush1.bf16.msra.mxu0 0
        %1107 = vmatprep.subr.bf16.mxu0 0
        %1108 = vmatpush1.bf16.msra.mxu0 0
        %1109 = vmatprep.subr.bf16.mxu0 0
        %1110 = vmatpush1.bf16.msra.mxu0 0
        %1111 = vmatprep.subr.bf16.mxu0 0
        %1112 = vmatpush1.bf16.msra.mxu0 0
        %1113 = vmatprep.subr.bf16.mxu0 0
        %1114 = vmatpush1.bf16.msra.mxu0 0
        %1115 = vmatprep.subr.bf16.mxu0 0
        %1116 = vmatpush1.bf16.msra.mxu0 0
        %1117 = vmatprep.subr.bf16.mxu0 0
        %1118 = vmatpush1.bf16.msra.mxu0 0
        %1119 = vmatprep.subr.bf16.mxu0 0
        %1120 = vmatpush1.bf16.msra.mxu0 %v1100
        %1121 = vmatprep.subr.bf16.mxu0 0
        %1122 = vmatpush2.bf16.msra.mxu0 0
        %1123 = vmatprep.subr.bf16.mxu0 0
        %1124 = vmatpush2.bf16.msra.mxu0 0
        %1125 = vmatprep.subr.bf16.mxu0 0
        %1126 = vmatpush2.bf16.msra.mxu0 0
        %1127 = vmatprep.subr.bf16.mxu0 0
        %1128 = vmatpush2.bf16.msra.mxu0 0
        %1129 = vmatprep.subr.bf16.mxu0 0
        %1130 = vmatpush2.bf16.msra.mxu0 0
        %1131 = vmatprep.subr.bf16.mxu0 0
        %1132 = vmatpush2.bf16.msra.mxu0 0
        %1133 = vmatprep.subr.bf16.mxu0 0
        %1134 = vmatpush2.bf16.msra.mxu0 0
        %1135 = vmatprep.subr.bf16.mxu0 0
        %1136 = vmatpush2.bf16.msra.mxu0 0
        %1137 = vmatprep.mubr.bf16.mxu0 0
        %1138 = vmatmul.mubr.bf16.gmra.mxu0 %v1103
        %v1139 = vpop.f32.mrf.mxu0
        %v1140 = vadd.f32 0.0, %v1139
        %v1141 = vpop.f32.mrf.mxu0
        %v1142 = vpop.f32.mrf.mxu0
        %v1143 = vadd.f32 0.0, %v1142
        %v1144 = vpop.f32.mrf.mxu0
        %1145 = vdwg.mxu0
        %v1146 = vrcp.pop %v1094
        %v1147 = vrcp.pop %v1097
        %v1148 = vmul.f32 %v1140, %v1146
        %v1149 = vmul.f32 %v1143, %v1147
        %1152 = vrot.lane.b32.xlu0 %v906, 8
        %v1153 = vpop.permute.xlu0 %1152
        %1154 = vrot.lane.b32.xlu0 %v907, 8
        %v1155 = vpop.permute.xlu0 %1154
        %1160 = vrot.lane.b32.xlu0 %v1027, 16
        %v1161 = vpop.permute.xlu0 %1160
        %1162 = vrot.lane.b32.xlu0 %v1028, 16
        %v1163 = vpop.permute.xlu0 %1162
        %1168 = vrot.lane.b32.xlu0 %v1148, 24
        %v1169 = vpop.permute.xlu0 %1168
        %1170 = vrot.lane.b32.xlu0 %v1149, 24
        %v1171 = vpop.permute.xlu0 %1170
        %v1174 = vsel %vm668, %v785, %v1153
        %v1175 = vsel %vm668, %v786, %v1155
        %v1176 = vsel %vm716, %v1174, %v1161
        %v1177 = vsel %vm716, %v1175, %v1163
        %vm1178 = vcmask 195584
        %v1179 = vsel %vm1178, %v1176, %v1169
        %v1180 = vsel %vm1178, %v1177, %v1171
        %v1181 = vpack.c.bf16 %v1180, %v1179
        %v1182 = vld [vmem:[%s546] sm:$0xf]
        %v1183 = vld [vmem:[%s546 + $0x4] sm:$0xf]
        %v1184 = vld [vmem:[%s546 + $0x8] sm:$0xf]
        %v1185 = vld [vmem:[%s546 + $0xc] sm:$0xf]
        %v1190 = vunpack.c.l.b16 %v1182
        %v1191 = vunpack.c.l.b16 %v1183
        %v1192 = vunpack.c.l.b16 %v1184
        %v1193 = vunpack.c.l.b16 %v1185
        %v1194 = vpack.c.b16 %v1191, %v1190
        %v1195 = vpack.c.b16 %v1193, %v1192
        %v1199 = vsel %vm579, %v1181, 0
        %1201 = vmatprep.subr.bf16.mxu0 0
        %1202 = vmatpush1.bf16.msra.mxu0 0
        %1203 = vmatprep.subr.bf16.mxu0 0
        %1204 = vmatpush1.bf16.msra.mxu0 0
        %1205 = vmatprep.subr.bf16.mxu0 0
        %1206 = vmatpush1.bf16.msra.mxu0 0
        %1207 = vmatprep.subr.bf16.mxu0 0
        %1208 = vmatpush1.bf16.msra.mxu0 0
        %1209 = vmatprep.subr.bf16.mxu0 0
        %1210 = vmatpush1.bf16.msra.mxu0 0
        %1211 = vmatprep.subr.bf16.mxu0 0
        %1212 = vmatpush1.bf16.msra.mxu0 0
        %1213 = vmatprep.subr.bf16.mxu0 0
        %1214 = vmatpush1.bf16.msra.mxu0 %v1195
        %1215 = vmatprep.subr.bf16.mxu0 0
        %1216 = vmatpush1.bf16.msra.mxu0 %v1194
        %1217 = vmatprep.subr.bf16.mxu0 0
        %1218 = vmatpush2.bf16.msra.mxu0 0
        %1219 = vmatprep.subr.bf16.mxu0 0
        %1220 = vmatpush2.bf16.msra.mxu0 0
        %1221 = vmatprep.subr.bf16.mxu0 0
        %1222 = vmatpush2.bf16.msra.mxu0 0
        %1223 = vmatprep.subr.bf16.mxu0 0
        %1224 = vmatpush2.bf16.msra.mxu0 0
        %1225 = vmatprep.subr.bf16.mxu0 0
        %1226 = vmatpush2.bf16.msra.mxu0 0
        %1227 = vmatprep.subr.bf16.mxu0 0
        %1228 = vmatpush2.bf16.msra.mxu0 0
        %1229 = vmatprep.subr.bf16.mxu0 0
        %1230 = vmatpush2.bf16.msra.mxu0 0
        %1231 = vmatprep.subr.bf16.mxu0 0
        %1232 = vmatpush2.bf16.msra.mxu0 0
        %1233 = vmatprep.mubr.bf16.mxu0 0
        %1234 = vmatmul.mubr.bf16.gmra.mxu0 %v1199
        %v1235 = vpop.f32.mrf.mxu0
        %v1236 = vadd.f32 0.0, %v1235
        %v1237 = vpop.f32.mrf.mxu0
        %v1238 = vpop.f32.mrf.mxu0
        %v1239 = vadd.f32 0.0, %v1238
        %v1240 = vpop.f32.mrf.mxu0
        %1241 = vdwg.mxu0
        %v1242 = vadd.f32 %v565, %v1236
        %v1243 = vadd.f32 %v566, %v1239
        %v1244 = vld [vmem:[%s549] sm:$0x1]
        %v1245 = vmul.f32 %v1242, %v1242
        %v1246 = vmul.f32 %v1243, %v1243
        %v1247 = vsel %vm579, %v1245, 0.0
        %1248 = vadd.xlane.f32.xlu0 %v1247
        %v1249 = vpop.xlane.xlu0 %1248
        %v1250 = vsel %vm579, %v1246, 0.0
        %1251 = vadd.xlane.f32.xlu0 %v1250
        %v1252 = vpop.xlane.xlu0 %1251
        %v1253 = vmul.f32 %v1249, %v586
        %v1254 = vmul.f32 %v1252, %v586
        %v1255 = vadd.f32 %v1253, 1e-05
        %v1256 = vadd.f32 %v1254, 1e-05
        %v1257 = vrsqrt.pop %v1255
        %v1258 = vrsqrt.pop %v1256
        %v1259 = vmul.f32 %v1242, %v1257
        %v1260 = vmul.f32 %v1243, %v1258
        %v1262 = vlaneseq
        %v1263 = vshrl.u32 %v1262, 7
        %v1264 = vsub.s32 0, %v1263
        %v1265 = vrot.slane %v1244, %v1264
        %v1267 = vmul.f32 %v1259, %v1265
        %v1268 = vmul.f32 %v1260, %v1265
        %v1269 = vpack.c.bf16 %v1268, %v1267
        %v1270 = vld [vmem:[%s462] sm:$0xf]
        %v1271 = vld [vmem:[%s462 + $0x4] sm:$0xf]
        %v1272 = vld [vmem:[%s462 + $0x8] sm:$0xf]
        %v1273 = vld [vmem:[%s462 + $0xc] sm:$0xf]
        %v1278 = vunpack.c.l.b16 %v1270
        %v1279 = vunpack.c.l.b16 %v1271
        %v1280 = vunpack.c.l.b16 %v1272
        %v1281 = vunpack.c.l.b16 %v1273
        %v1282 = vpack.c.b16 %v1279, %v1278
        %v1283 = vpack.c.b16 %v1281, %v1280
        %v1287 = vsel %vm579, %v1269, 0
        %1289 = vmatprep.subr.bf16.mxu0 0
        %1290 = vmatpush1.bf16.msra.mxu0 0
        %1291 = vmatprep.subr.bf16.mxu0 0
        %1292 = vmatpush1.bf16.msra.mxu0 0
        %1293 = vmatprep.subr.bf16.mxu0 0
        %1294 = vmatpush1.bf16.msra.mxu0 0
        %1295 = vmatprep.subr.bf16.mxu0 0
        %1296 = vmatpush1.bf16.msra.mxu0 0
        %1297 = vmatprep.subr.bf16.mxu0 0
        %1298 = vmatpush1.bf16.msra.mxu0 0
        %1299 = vmatprep.subr.bf16.mxu0 0
        %1300 = vmatpush1.bf16.msra.mxu0 0
        %1301 = vmatprep.subr.bf16.mxu0 0
        %1302 = vmatpush1.bf16.msra.mxu0 %v1283
        %1303 = vmatprep.subr.bf16.mxu0 0
        %1304 = vmatpush1.bf16.msra.mxu0 %v1282
        %1305 = vmatprep.subr.bf16.mxu0 0
        %1306 = vmatpush2.bf16.msra.mxu0 0
        %1307 = vmatprep.subr.bf16.mxu0 0
        %1308 = vmatpush2.bf16.msra.mxu0 0
        %1309 = vmatprep.subr.bf16.mxu0 0
        %1310 = vmatpush2.bf16.msra.mxu0 0
        %1311 = vmatprep.subr.bf16.mxu0 0
        %1312 = vmatpush2.bf16.msra.mxu0 0
        %1313 = vmatprep.subr.bf16.mxu0 0
        %1314 = vmatpush2.bf16.msra.mxu0 0
        %1315 = vmatprep.subr.bf16.mxu0 0
        %1316 = vmatpush2.bf16.msra.mxu0 0
        %1317 = vmatprep.subr.bf16.mxu0 0
        %1318 = vmatpush2.bf16.msra.mxu0 0
        %1319 = vmatprep.subr.bf16.mxu0 0
        %1320 = vmatpush2.bf16.msra.mxu0 0
        %1321 = vmatprep.mubr.bf16.mxu0 0
        %1322 = vmatmul.mubr.bf16.gmra.mxu0 %v1287
        %v1323 = vpop.f32.mrf.mxu0
        %v1324 = vadd.f32 0.0, %v1323
        %v1325 = vpop.f32.mrf.mxu0
        %v1326 = vpop.f32.mrf.mxu0
        %v1327 = vadd.f32 0.0, %v1326
        %v1328 = vpop.f32.mrf.mxu0
        %1329 = vdwg.mxu0
        %v1330 = vxor.u32 %v1324, 2147483648
        %v1331 = vxor.u32 %v1327, 2147483648
        %v1332 = vmul.f32 %v1330, 1.442695
        %v1333 = vpow.pop %v1332
        %v1334 = vmul.f32 %v1331, 1.442695
        %v1335 = vpow.pop %v1334
        %v1336 = vadd.f32 %v1333, 1.0
        %v1337 = vadd.f32 %v1335, 1.0
        %v1338 = vrcp.pop %v1336
        %v1339 = vmul.f32 1.0, %v1338
        %v1340 = vrcp.pop %v1337
        %v1341 = vmul.f32 1.0, %v1340
        %v1342 = vmul.f32 %v1324, %v1339
        %v1343 = vmul.f32 %v1327, %v1341
        %1346 = vrot.lane.b32.xlu0 %v1324, 64
        %v1347 = vpop.permute.xlu0 %1346
        %1348 = vrot.lane.b32.xlu0 %v1327, 64
        %v1349 = vpop.permute.xlu0 %1348
        %v1352 = vmul.f32 %v1342, %v1347
        %v1353 = vmul.f32 %v1343, %v1349
        %v1354 = vpack.c.bf16 %v1353, %v1352
        %v1355 = vld [vmem:[%s554] sm:$0xf]
        %v1356 = vld [vmem:[%s554 + $0x4] sm:$0xf]
        %v1357 = vld [vmem:[%s554 + $0x8] sm:$0xf]
        %v1358 = vld [vmem:[%s554 + $0xc] sm:$0xf]
        %v1359 = vld [vmem:[%s554 + $0x10] sm:$0xf]
        %v1360 = vld [vmem:[%s554 + $0x14] sm:$0xf]
        %v1361 = vld [vmem:[%s554 + $0x18] sm:$0xf]
        %v1362 = vld [vmem:[%s554 + $0x1c] sm:$0xf]
        %v1371 = vunpack.c.l.b16 %v1355
        %v1372 = vunpack.c.l.b16 %v1356
        %v1373 = vunpack.c.l.b16 %v1357
        %v1374 = vunpack.c.l.b16 %v1358
        %v1375 = vunpack.c.l.b16 %v1359
        %v1376 = vunpack.c.l.b16 %v1360
        %v1377 = vunpack.c.l.b16 %v1361
        %v1378 = vunpack.c.l.b16 %v1362
        %v1379 = vpack.c.b16 %v1372, %v1371
        %v1380 = vpack.c.b16 %v1374, %v1373
        %v1381 = vpack.c.b16 %v1376, %v1375
        %v1382 = vpack.c.b16 %v1378, %v1377
        %vm1387 = vcmask 523264
        %v1389 = vsel %vm1387, %v1354, 0
        %1391 = vmatprep.subr.bf16.mxu0 0
        %1392 = vmatpush1.bf16.msra.mxu0 0
        %1393 = vmatprep.subr.bf16.mxu0 0
        %1394 = vmatpush1.bf16.msra.mxu0 0
        %1395 = vmatprep.subr.bf16.mxu0 0
        %1396 = vmatpush1.bf16.msra.mxu0 0
        %1397 = vmatprep.subr.bf16.mxu0 0
        %1398 = vmatpush1.bf16.msra.mxu0 0
        %1399 = vmatprep.subr.bf16.mxu0 0
        %1400 = vmatpush1.bf16.msra.mxu0 %v1382
        %1401 = vmatprep.subr.bf16.mxu0 0
        %1402 = vmatpush1.bf16.msra.mxu0 %v1381
        %1403 = vmatprep.subr.bf16.mxu0 0
        %1404 = vmatpush1.bf16.msra.mxu0 %v1380
        %1405 = vmatprep.subr.bf16.mxu0 0
        %1406 = vmatpush1.bf16.msra.mxu0 %v1379
        %1407 = vmatprep.subr.bf16.mxu0 0
        %1408 = vmatpush2.bf16.msra.mxu0 0
        %1409 = vmatprep.subr.bf16.mxu0 0
        %1410 = vmatpush2.bf16.msra.mxu0 0
        %1411 = vmatprep.subr.bf16.mxu0 0
        %1412 = vmatpush2.bf16.msra.mxu0 0
        %1413 = vmatprep.subr.bf16.mxu0 0
        %1414 = vmatpush2.bf16.msra.mxu0 0
        %1415 = vmatprep.subr.bf16.mxu0 0
        %1416 = vmatpush2.bf16.msra.mxu0 0
        %1417 = vmatprep.subr.bf16.mxu0 0
        %1418 = vmatpush2.bf16.msra.mxu0 0
        %1419 = vmatprep.subr.bf16.mxu0 0
        %1420 = vmatpush2.bf16.msra.mxu0 0
        %1421 = vmatprep.subr.bf16.mxu0 0
        %1422 = vmatpush2.bf16.msra.mxu0 0
        %1423 = vmatprep.mubr.bf16.mxu0 0
        %1424 = vmatmul.mubr.bf16.gmra.mxu0 %v1389
        %v1425 = vpop.f32.mrf.mxu0
        %v1426 = vadd.f32 0.0, %v1425
        %v1427 = vpop.f32.mrf.mxu0
        %v1428 = vpop.f32.mrf.mxu0
        %v1429 = vadd.f32 0.0, %v1428
        %v1430 = vpop.f32.mrf.mxu0
        %1431 = vdwg.mxu0
        %v1432 = vadd.f32 %v1242, %v1426
        %v1433 = vadd.f32 %v1243, %v1429
        %1434 = vst.msk [vmem:[#allocation2] sm:$0xff] %vm579, %v1432
        %1435 = vst.msk [vmem:[#allocation2 + $0x8] sm:$0xff] %vm579, %v1433
        %p1436 = scmp.eq.s32.totalorder %s40, 1
        // Predicated region
        $region73: #{tpu_custom_call.1} parent=59 // pred_check
          %p1437 = pneg %p1436
        $region74: #{tpu_custom_call.1} parent=59 // pred_check_branch
          %1439 = sbr.rel (%p1437) target = $region76
        $region75: #{tpu_custom_call.1} parent=59 // pred_region
          %v1440 = vld [vmem:[%s7] sm:$0x1]
          %v1441 = vmul.f32 %v1432, %v1432
          %v1442 = vmul.f32 %v1433, %v1433
          %v1443 = vsel %vm579, %v1441, 0.0
          %1444 = vadd.xlane.f32.xlu0 %v1443
          %v1445 = vpop.xlane.xlu0 %1444
          %v1446 = vsel %vm579, %v1442, 0.0
          %1447 = vadd.xlane.f32.xlu0 %v1446
          %v1448 = vpop.xlane.xlu0 %1447
          %v1449 = vmul.f32 %v1445, %v586
          %v1450 = vmul.f32 %v1448, %v586
          %v1451 = vadd.f32 %v1449, 1e-05
          %v1452 = vadd.f32 %v1450, 1e-05
          %v1453 = vrsqrt.pop %v1451
          %v1454 = vrsqrt.pop %v1452
          %v1455 = vmul.f32 %v1432, %v1453
          %v1456 = vmul.f32 %v1433, %v1454
          %v1458 = vlaneseq
          %v1459 = vshrl.u32 %v1458, 7
          %v1460 = vsub.s32 0, %v1459
          %v1461 = vrot.slane %v1440, %v1460
          %v1463 = vmul.f32 %v1455, %v1461
          %v1464 = vmul.f32 %v1456, %v1461
          %v1465 = vld [vmem:[%s8] sm:$0x3]
          %v1466 = vpack.c.bf16 %v1464, %v1463
          %v1468 = vsel %vm716, %v1465, 0
          %1470 = vmatprep.subr.bf16.mxu0 0
          %1471 = vmatpush1.bf16.msra.mxu0 0
          %1472 = vmatprep.subr.bf16.mxu0 0
          %1473 = vmatpush1.bf16.msra.mxu0 0
          %1474 = vmatprep.subr.bf16.mxu0 0
          %1475 = vmatpush1.bf16.msra.mxu0 0
          %1476 = vmatprep.subr.bf16.mxu0 0
          %1477 = vmatpush1.bf16.msra.mxu0 0
          %1478 = vmatprep.subr.bf16.mxu0 0
          %1479 = vmatpush1.bf16.msra.mxu0 0
          %1480 = vmatprep.subr.bf16.mxu0 0
          %1481 = vmatpush1.bf16.msra.mxu0 0
          %1482 = vmatprep.subr.bf16.mxu0 0
          %1483 = vmatpush1.bf16.msra.mxu0 0
          %1484 = vmatprep.subr.bf16.mxu0 0
          %1485 = vmatpush1.bf16.msra.mxu0 %v1466
          %1486 = vmatprep.subr.bf16.mxu0 0
          %1487 = vmatpush2.bf16.msra.mxu0 0
          %1488 = vmatprep.subr.bf16.mxu0 0
          %1489 = vmatpush2.bf16.msra.mxu0 0
          %1490 = vmatprep.subr.bf16.mxu0 0
          %1491 = vmatpush2.bf16.msra.mxu0 0
          %1492 = vmatprep.subr.bf16.mxu0 0
          %1493 = vmatpush2.bf16.msra.mxu0 0
          %1494 = vmatprep.subr.bf16.mxu0 0
          %1495 = vmatpush2.bf16.msra.mxu0 0
          %1496 = vmatprep.subr.bf16.mxu0 0
          %1497 = vmatpush2.bf16.msra.mxu0 0
          %1498 = vmatprep.subr.bf16.mxu0 0
          %1499 = vmatpush2.bf16.msra.mxu0 0
          %1500 = vmatprep.subr.bf16.mxu0 0
          %1501 = vmatpush2.bf16.msra.mxu0 0
          %1502 = vmatprep.mubr.bf16.mxu0 0
          %1503 = vmatmul.mubr.bf16.gmra.mxu0 %v1468
          %v1504 = vpop.f32.mrf.mxu0
          %v1505 = vadd.f32 0.0, %v1504
          %v1506 = vpop.f32.mrf.mxu0
          %v1507 = vpop.f32.mrf.mxu0
          %v1508 = vpop.f32.mrf.mxu0
          %1509 = vdwg.mxu0
          %v1510 = vld [vmem:[%s9] sm:$0x1]
          %v1511 = vpack.c.bf16 %v1505, %v1505
          %v1513 = vsel %vm579, %v1510, 0
          %v1516 = vsel %vm579, %v1511, 0
          %1518 = vmatprep.subr.bf16.mxu0 0
          %1519 = vmatpush1.bf16.xpose.msra.mxu0 0
          %1520 = vmatprep.subr.bf16.mxu0 0
          %1521 = vmatpush1.bf16.xpose.msra.mxu0 0
          %1522 = vmatprep.subr.bf16.mxu0 0
          %1523 = vmatpush1.bf16.xpose.msra.mxu0 0
          %1524 = vmatprep.subr.bf16.mxu0 0
          %1525 = vmatpush1.bf16.xpose.msra.mxu0 0
          %1526 = vmatprep.subr.bf16.mxu0 0
          %1527 = vmatpush1.bf16.xpose.msra.mxu0 0
          %1528 = vmatprep.subr.bf16.mxu0 0
          %1529 = vmatpush1.bf16.xpose.msra.mxu0 0
          %1530 = vmatprep.subr.bf16.mxu0 0
          %1531 = vmatpush1.bf16.xpose.msra.mxu0 0
          %1532 = vmatprep.subr.bf16.mxu0 0
          %1533 = vmatpush1.bf16.xpose.msra.mxu0 %v1516
          %1534 = vmatprep.subr.bf16.mxu0 0
          %1535 = vmatpush2.bf16.xpose.msra.mxu0 0
          %1536 = vmatprep.subr.bf16.mxu0 0
          %1537 = vmatpush2.bf16.xpose.msra.mxu0 0
          %1538 = vmatprep.subr.bf16.mxu0 0
          %1539 = vmatpush2.bf16.xpose.msra.mxu0 0
          %1540 = vmatprep.subr.bf16.mxu0 0
          %1541 = vmatpush2.bf16.xpose.msra.mxu0 0
          %1542 = vmatprep.subr.bf16.mxu0 0
          %1543 = vmatpush2.bf16.xpose.msra.mxu0 0
          %1544 = vmatprep.subr.bf16.mxu0 0
          %1545 = vmatpush2.bf16.xpose.msra.mxu0 0
          %1546 = vmatprep.subr.bf16.mxu0 0
          %1547 = vmatpush2.bf16.xpose.msra.mxu0 0
          %1548 = vmatprep.subr.bf16.mxu0 0
          %1549 = vmatpush2.bf16.xpose.msra.mxu0 0
          %1550 = vmatprep.mubr.bf16.mxu0 0
          %1551 = vmatmul.mubr.bf16.gmra.mxu0 %v1513
          %v1552 = vpop.f32.mrf.mxu0
          %v1553 = vadd.f32 0.0, %v1552
          %v1554 = vpop.f32.mrf.mxu0
          %v1555 = vpop.f32.mrf.mxu0
          %v1556 = vpop.f32.mrf.mxu0
          %1557 = vdwg.mxu0
          %vm1558 = vcmask 257024
          %1559 = vst.msk [vmem:[%s525] sm:$0xf] %vm1558, %v1505
          %vm1560 = vcmask 24576
          %1561 = vst.msk [vmem:[%s531] sm:$0x1] %vm1560, %v1553
        $region76: #{tpu_custom_call.1} parent=59 // pred_fallthru
          _
        %s1562 = sand.u32 %s300, 1
        %s1563 = scalar_lea.sflag [#allocation5], %s1562
        %s1564 = sand.u32 %s300, 1
        %s1565 = smul.addr %s1564, 4
        %s1566 = scalar_lea.vmem [#allocation8], %s1565
        %s1567 = sand.u32 %s326, 1
        %s1568 = scalar_lea.sflag [#allocation10], %s1567
        %s1569 = sand.u32 %s326, 1
        %s1570 = scalar_lea.vmem [#allocation9], %s1569
        // Predicated region
        $region77: #{tpu_custom_call.1} parent=59 // pred_check
          %p1571 = pneg %p310
        $region78: #{tpu_custom_call.1} parent=59 // pred_check_branch
          %1573 = sbr.rel (%p1571) target = $region80
        $region79: #{tpu_custom_call.1} parent=59 // pred_region
          %s1575 = ssub.s32 64, 64
          %1576 = vsyncadd %s1563, %s1575
          %s1577 = smul.addr %s39, 64
          %s1578 = scalar_lea.hbm %s10, %s1577
          %s1580 = sshll.u32 %s1566, 4
          %s1581 = int_to_ptr.vmem [resolvable:$true] %s1580
          %1583 = dma.vmem_to_hbm [thread:$0]  %s1581, 64, %s1578, %s1563
        $region80: #{tpu_custom_call.1} parent=59 // pred_fallthru
          _
        // Predicated region
        $region81: #{tpu_custom_call.1} parent=59 // pred_check
          %p1584 = pneg %p336
        $region82: #{tpu_custom_call.1} parent=59 // pred_check_branch
          %1586 = sbr.rel (%p1584) target = $region84
        $region83: #{tpu_custom_call.1} parent=59 // pred_region
          %s1588 = ssub.s32 16, 16
          %1589 = vsyncadd %s1568, %s1588
          %s1590 = smul.addr %s39, 16
          %s1591 = scalar_lea.hbm %s11, %s1590
          %s1593 = sshll.u32 %s1570, 4
          %s1594 = int_to_ptr.vmem [resolvable:$true] %s1593
          %1596 = dma.vmem_to_hbm [thread:$0]  %s1594, 16, %s1591, %s1568
        $region84: #{tpu_custom_call.1} parent=59 // pred_fallthru
          _
      $region60: #{tpu_custom_call.1} parent=5 // pred_fallthru
        _
      %p1597 = scmp.le.s32.totalorder 2, %s30
      // Predicated region
      $region85: #{tpu_custom_call.1} parent=5 // pred_check
        %p1598 = pneg %p1597
      $region86: #{tpu_custom_call.1} parent=5 // pred_check_branch
        %1600 = sbr.rel (%p1598) target = $region88
      $region87: #{tpu_custom_call.1} parent=5 // pred_region
        %s1601 = ssub.s32 %s30, 2
        // Predicated region
        $region89: #{tpu_custom_call.1} parent=87 // pred_check
          %p1602 = pneg %p316
        $region90: #{tpu_custom_call.1} parent=87 // pred_check_branch
          %1604 = sbr.rel (%p1602) target = $region92
        $region91: #{tpu_custom_call.1} parent=87 // pred_region
          %s1605 = sand.u32 %s301, 1
          %s1606 = scalar_lea.sflag [#allocation5], %s1605
          %s1607 = sand.u32 %s301, 1
          %s1608 = smul.addr %s1607, 4
          %s1609 = scalar_lea.vmem [#allocation8], %s1608
          %1610 = dma.done %s1606, 64
        $region92: #{tpu_custom_call.1} parent=87 // pred_fallthru
          _
        // Predicated region
        $region93: #{tpu_custom_call.1} parent=87 // pred_check
          %p1611 = pneg %p342
        $region94: #{tpu_custom_call.1} parent=87 // pred_check_branch
          %1613 = sbr.rel (%p1611) target = $region96
        $region95: #{tpu_custom_call.1} parent=87 // pred_region
          %s1614 = sand.u32 %s327, 1
          %s1615 = scalar_lea.sflag [#allocation10], %s1614
          %s1616 = sand.u32 %s327, 1
          %s1617 = scalar_lea.vmem [#allocation9], %s1616
          %1618 = dma.done %s1615, 16
        $region96: #{tpu_custom_call.1} parent=87 // pred_fallthru
          _
      $region88: #{tpu_custom_call.1} parent=5 // pred_fallthru
        _
    $region6: #{tpu_custom_call.1} parent=1 // loop_footer
      %s34 = sadd.s32 1, %s30
    $region7: #{tpu_custom_call.1} parent=1 // loop_footer_branch
      %29 = sbr.rel target = $region3
    $region8: #{tpu_custom_call.1} parent=1 // loop_exit
      _
    %1619 = vsyncpa [#allocation4], 1
    %s1620 = scalar_lea.sflag [#allocation4], 1
    %1621 = vsyncpa %s1620, 1
    %1622 = vsyncpa [#allocation7], 1
    %s1623 = scalar_lea.sflag [#allocation7], 1
    %1624 = vsyncpa %s1623, 1
    %1625 = vsyncpa [#allocation5], 1
    %s1626 = scalar_lea.sflag [#allocation5], 1
    %1627 = vsyncpa %s1626, 1
    %1628 = vsyncpa [#allocation10], 1
    %s1629 = scalar_lea.sflag [#allocation10], 1
    %1630 = vsyncpa %s1629, 1

</llo_original>
